<compile_context>
chip_gen: v7x
topology: tpu7x:2x2x1
jax: 0.10.0
libtpu: 0.0.40
codegen_flags: <defaults>
</compile_context>

<pallas_src>
import jax
import jax.numpy as jnp
from jax.experimental import pallas as pl
from jax.experimental.pallas import tpu as pltpu


def _pad_to(n: int, m: int) -> int:
    return ((n + m - 1) // m) * m


def _make_snn_kernel(num_hidden, hidden_out_pads, out_pad, t_blk, b_pad, in_pad):
    """Fused kernel: one grid step == T_blk SNN timesteps. v-states in VMEM scratch."""

    def kernel(*refs):
        z_ref = refs[0]                               # (t_blk, b_pad, in_pad)
        w_refs = refs[1:1 + num_hidden]               # (in_pad_l, out_pad_l) each
        w_out_ref = refs[1 + num_hidden]              # (last_pad, out_pad)
        params_ref = refs[2 + num_hidden]             # (2H+1, p_max) packed params
        out_ref = refs[3 + num_hidden]                # (t_blk, b_pad, out_pad)
        v_scratch = refs[4 + num_hidden:]             # H hidden v-states + readout v

        @pl.when(pl.program_id(0) == 0)
        def _init_states():
            for s in v_scratch:
                s[...] = jnp.zeros_like(s)

        # ---- hoisted, per-block work (outside the time loop) -------------------
        # Per-neuron params, broadcast to full (b_pad, op) once per block.
        thresh_b, decay_b = [], []
        for l in range(num_hidden):
            op = hidden_out_pads[l]
            thresh_b.append(jnp.broadcast_to(params_ref[2 * l:2 * l + 1, :op],
                                             (b_pad, op)))
            decay_b.append(jnp.broadcast_to(params_ref[2 * l + 1:2 * l + 2, :op],
                                            (b_pad, op)))
        decay_out_b = jnp.broadcast_to(
            params_ref[2 * num_hidden:2 * num_hidden + 1, :out_pad], (b_pad, out_pad))

        # Layer-0 currents for ALL timesteps of this block: one big MXU call.
        z_all = z_ref[...].reshape(t_blk * b_pad, in_pad)
        i0_all = jnp.dot(z_all, w_refs[0][...],
                         preferred_element_type=jnp.float32)   # (t_blk*b_pad, h0)

        # Carried LIF states: loaded once per block, kept register-resident.
        v_hidden = [v_scratch[l][...] for l in range(num_hidden)]
        v_out = v_scratch[num_hidden][...]

        # ---- unrolled time loop -------------------------------------------------
        for t in range(t_blk):
            i = i0_all[t * b_pad:(t + 1) * b_pad, :]            # static slice
            z = None
            for l in range(num_hidden):
                if l > 0:
                    i = jnp.dot(z, w_refs[l][...],
                                preferred_element_type=jnp.float32)
                # state already carries the reset: v_state == v_prev * (1 - z_prev)
                v = v_hidden[l] * decay_b[l] + i
                spiked = v > thresh_b[l]
                z = spiked.astype(jnp.float32)
                v_hidden[l] = jnp.where(spiked, 0.0, v)
            # non-spiking readout
            i = jnp.dot(z, w_out_ref[...], preferred_element_type=jnp.float32)
            v_out = v_out * decay_out_b + i
            out_ref[t] = v_out.astype(out_ref.dtype)

        # Write carried states back for the next time block.
        for l in range(num_hidden):
            v_scratch[l][...] = v_hidden[l]
        v_scratch[num_hidden][...] = v_out

    return kernel


def prepare_snn_params(hidden_params, out_params, snn_sizes, output_size):
    """One-time parameter preparation: transpose, cast, zero-pad, pack.

    hidden_params: list of (W (out,in), thresh (out,), v_decay (out,))  [PyTorch layout]
    out_params:    (W_out (out_size, in), v_decay_out (out_size,))
    """
    num_hidden = len(hidden_params)
    hidden_out_pads = tuple(_pad_to(s, 128) for s in snn_sizes[1:])
    in_pad = _pad_to(snn_sizes[0], 128)
    out_pad = _pad_to(output_size, 128)
    p_max = max(list(hidden_out_pads) + [out_pad])

    # Pre-transposed, zero-padded weights: (in_pad, out_pad) so kernel does z @ W.
    ws = []
    for l, (w, _, _) in enumerate(hidden_params):
        fan_out, fan_in = w.shape
        ip = _pad_to(fan_in, 128)
        op = hidden_out_pads[l]
        wt = jnp.zeros((ip, op), jnp.float32).at[:fan_in, :fan_out].set(
            jnp.asarray(w, jnp.float32).T)
        ws.append(wt)

    w_out, v_decay_out = out_params
    fan_in = w_out.shape[1]
    w_out_p = jnp.zeros((_pad_to(fan_in, 128), out_pad), jnp.float32).at[
        :fan_in, :output_size].set(jnp.asarray(w_out, jnp.float32).T)

    # Packed per-neuron params: rows [2l]=thresh_l, [2l+1]=v_decay_l, last=readout decay.
    rows = []
    for l, (_, thresh, v_decay) in enumerate(hidden_params):
        tr = jnp.full((p_max,), 1e30, jnp.float32).at[:thresh.shape[0]].set(
            jnp.asarray(thresh, jnp.float32))                 # padded neurons never spike
        dr = jnp.zeros((p_max,), jnp.float32).at[:v_decay.shape[0]].set(
            jnp.asarray(v_decay, jnp.float32))
        rows.append(tr)
        rows.append(dr)
    rows.append(jnp.zeros((p_max,), jnp.float32).at[:output_size].set(
        jnp.asarray(v_decay_out, jnp.float32)))
    params_packed = jnp.stack(rows, axis=0)                    # (2H+1, p_max)

    meta = dict(num_hidden=num_hidden, output_size=output_size,
                in_pad=in_pad, hidden_out_pads=hidden_out_pads, out_pad=out_pad)
    return dict(ws=ws, w_out=w_out_p, params=params_packed, meta=meta)


def snn_forward_seq(z_seq, prepared, t_blk=None):
    """Run T successive SNN.forward() steps (fresh state) in one fused kernel.

    z_seq: (T, B, snn_sizes[0]) float32
    returns: (T, B, output_size) float32  -- output of each timestep
    """
    meta = prepared["meta"]
    num_hidden = meta["num_hidden"]
    hidden_out_pads = meta["hidden_out_pads"]
    in_pad = meta["in_pad"]
    out_pad = meta["out_pad"]
    output_size = meta["output_size"]

    T, B, in_feat = z_seq.shape
    b_pad = _pad_to(B, 8)

    # Time blocking: fuse the whole rollout for short T; block long rollouts so the
    # kernel trace stays small while each grid step still amortizes grid overhead.
    if t_blk is None:
        t_blk = T if T <= 16 else 16
    n_blocks = pl.cdiv(T, t_blk)
    t_pad = n_blocks * t_blk

    # TODO(synk): for very long rollouts, skip the host-side lane pad (16 -> 128) by
    # passing z_seq with its natural feature width and padding inside the kernel.
    z_padded = jnp.zeros((t_pad, b_pad, in_pad), jnp.float32).at[:T, :B, :in_feat].set(
        z_seq.astype(jnp.float32))

    ws = prepared["ws"]
    w_out = prepared["w_out"]
    params = prepared["params"]

    in_specs = [pl.BlockSpec((t_blk, b_pad, in_pad), lambda t: (t, 0, 0))]
    for w in ws:
        in_specs.append(pl.BlockSpec(w.shape, lambda t: (0, 0)))      # VMEM-resident
    in_specs.append(pl.BlockSpec(w_out.shape, lambda t: (0, 0)))
    in_specs.append(pl.BlockSpec(params.shape, lambda t: (0, 0)))

    scratch_shapes = []
    for op in hidden_out_pads:
        scratch_shapes.append(pltpu.VMEM((b_pad, op), jnp.float32))   # v state (reset-applied)
    scratch_shapes.append(pltpu.VMEM((b_pad, out_pad), jnp.float32))  # readout v state

    kernel = _make_snn_kernel(num_hidden, hidden_out_pads, out_pad,
                              t_blk, b_pad, in_pad)

    out = pl.pallas_call(
        kernel,
        out_shape=jax.ShapeDtypeStruct((t_pad, b_pad, out_pad), jnp.float32),
        grid_spec=pltpu.PrefetchScalarGridSpec(
            num_scalar_prefetch=0,
            grid=(n_blocks,),
            in_specs=in_specs,
            out_specs=pl.BlockSpec((t_blk, b_pad, out_pad), lambda t: (t, 0, 0)),
            scratch_shapes=scratch_shapes,
        ),
        compiler_params=pltpu.CompilerParams(
            # recurrent state carried across time blocks -> must stay sequential
            dimension_semantics=("arbitrary",)),
    )(z_padded, *ws, w_out, params)

    return out[:T, :B, :output_size]


def snn_forward_seq_reference(z_seq, hidden_params, out_params):
    """Pure-JAX reference: T successive PyTorch-style forward calls with carried state."""
    T = z_seq.shape[0]
    hidden_states = [None] * len(hidden_params)
    out_state = None
    outs = []
    for t in range(T):
        z = z_seq[t].astype(jnp.float32)
        for l, (w, thresh, v_decay) in enumerate(hidden_params):
            i = z @ w.T
            if hidden_states[l] is None:
                z_st, v_st = jnp.zeros_like(i), jnp.zeros_like(i)
            else:
                z_st, v_st = hidden_states[l]
            v = v_st * v_decay[None, :] * (1.0 - z_st) + i
            z = (v - thresh[None, :] > 0.0).astype(jnp.float32)
            hidden_states[l] = (z, v)
        w_out, v_decay_out = out_params
        i = z @ w_out.T
        v_prev = jnp.zeros_like(i) if out_state is None else out_state
        v = v_prev * v_decay_out[None, :] + i
        out_state = v
        outs.append(v)
    return jnp.stack(outs, axis=0)


def init_params(key, snn_sizes, output_size):
    """Deterministic parameter init matching the PyTorch __init__ distributions."""
    hidden_params = []
    for i in range(1, len(snn_sizes)):
        fan_in, fan_out = snn_sizes[i - 1], snn_sizes[i]
        key, kw, kd, kt = jax.random.split(key, 4)
        bound = 1.0 / jnp.sqrt(fan_in)
        w = jax.random.uniform(kw, (fan_out, fan_in), jnp.float32, -bound, bound)
        v_decay = jax.random.uniform(kd, (fan_out,), jnp.float32, 0.1, 0.7)
        thresh = jax.random.uniform(kt, (fan_out,), jnp.float32, 0.7, 0.95)
        hidden_params.append((w, thresh, v_decay))
    fan_in = snn_sizes[-1]
    key, kw, kd = jax.random.split(key, 3)
    bound = 1.0 / jnp.sqrt(fan_in)
    w_out = jax.random.uniform(kw, (output_size, fan_in), jnp.float32, -bound, bound)
    v_decay_out = jax.random.uniform(kd, (output_size,), jnp.float32, 0.8, 0.85)
    return hidden_params, (w_out, v_decay_out)


if __name__ == "__main__":
    snn_sizes = [16, 32, 32]   # [input, hidden1, hidden2]
    output_size = 2            # 2D flight control outputs
    batch = 4
    T = 8                      # timesteps fused into a single grid step

    key = jax.random.PRNGKey(0)
    key, k_in = jax.random.split(key)
    z_seq = jax.random.uniform(k_in, (T, batch, snn_sizes[0]), jnp.float32, 0.0, 1.0)

    hidden_params, out_params = init_params(key, snn_sizes, output_size)

    # One-time: transpose / pad / pack parameters (hoisted out of the per-call path).
    prepared = prepare_snn_params(hidden_params, out_params, snn_sizes, output_size)

    fwd = jax.jit(lambda zs: snn_forward_seq(zs, prepared))
    out = jax.block_until_ready(fwd(z_seq))

    ref = snn_forward_seq_reference(z_seq, hidden_params, out_params)
    assert out.shape == (T, batch, output_size)
    assert jnp.allclose(out, ref, atol=1e-4, rtol=1e-4), float(jnp.max(jnp.abs(out - ref)))

    print("KERNEL_OK")
</pallas_src>

<mosaic_0001>
module attributes {stable_mosaic.version = 11 : i64} {
  func.func @kernel(%arg0: i32, %arg1: memref<8x8x128xf32, #tpu.memory_space<vmem>>, %arg2: memref<128x128xf32, #tpu.memory_space<vmem>>, %arg3: memref<128x128xf32, #tpu.memory_space<vmem>>, %arg4: memref<128x128xf32, #tpu.memory_space<vmem>>, %arg5: memref<5x128xf32, #tpu.memory_space<vmem>>, %arg6: memref<8x8x128xf32, #tpu.memory_space<vmem>>, %arg7: memref<8x128xf32, #tpu.memory_space<vmem>>, %arg8: memref<8x128xf32, #tpu.memory_space<vmem>>, %arg9: memref<8x128xf32, #tpu.memory_space<vmem>>) attributes {dimension_semantics = [#tpu.dimension_semantics<arbitrary>], iteration_bounds = array<i64: 1>, scalar_prefetch = 0 : i64, scratch_operands = 3 : i64, tpu.core_type = #tpu.core_type<tc>, window_params = [{transform_indices = @transform_0, window_bounds = array<i64: 8, 8, 128>}, {pipeline_mode = #tpu.pipeline_mode<synchronous>, transform_indices = @transform_1, window_bounds = array<i64: 128, 128>}, {pipeline_mode = #tpu.pipeline_mode<synchronous>, transform_indices = @transform_2, window_bounds = array<i64: 128, 128>}, {pipeline_mode = #tpu.pipeline_mode<synchronous>, transform_indices = @transform_3, window_bounds = array<i64: 128, 128>}, {pipeline_mode = #tpu.pipeline_mode<synchronous>, transform_indices = @transform_4, window_bounds = array<i64: 5, 128>}, {transform_indices = @transform_5, window_bounds = array<i64: 8, 8, 128>}]} {
    %c0_i32 = arith.constant 0 : i32
    %0 = arith.cmpi eq, %arg0, %c0_i32 : i32
    %1 = arith.extui %0 : i1 to i32
    %c0_i32_0 = arith.constant 0 : i32
    %2 = arith.cmpi ne, %1, %c0_i32_0 : i32
    scf.if %2 {
      %cst_108 = arith.constant 0.000000e+00 : f32
      %220 = vector.broadcast %cst_108 : f32 to vector<8x128xf32>
      %c0_109 = arith.constant 0 : index
      %c0_110 = arith.constant 0 : index
      %221 = vector.load %arg7[%c0_109, %c0_110] : memref<8x128xf32, #tpu.memory_space<vmem>>, vector<8x128xf32>
      tpu.vector_store %arg7[%c0_109, %c0_110], %220 {strides = array<i32>} : memref<8x128xf32, #tpu.memory_space<vmem>>, vector<8x128xf32>,
      %cst_111 = arith.constant 0.000000e+00 : f32
      %222 = vector.broadcast %cst_111 : f32 to vector<8x128xf32>
      %c0_112 = arith.constant 0 : index
      %c0_113 = arith.constant 0 : index
      %223 = vector.load %arg8[%c0_112, %c0_113] : memref<8x128xf32, #tpu.memory_space<vmem>>, vector<8x128xf32>
      tpu.vector_store %arg8[%c0_112, %c0_113], %222 {strides = array<i32>} : memref<8x128xf32, #tpu.memory_space<vmem>>, vector<8x128xf32>,
      %cst_114 = arith.constant 0.000000e+00 : f32
      %224 = vector.broadcast %cst_114 : f32 to vector<8x128xf32>
      %c0_115 = arith.constant 0 : index
      %c0_116 = arith.constant 0 : index
      %225 = vector.load %arg9[%c0_115, %c0_116] : memref<8x128xf32, #tpu.memory_space<vmem>>, vector<8x128xf32>
      tpu.vector_store %arg9[%c0_115, %c0_116], %224 {strides = array<i32>} : memref<8x128xf32, #tpu.memory_space<vmem>>, vector<8x128xf32>,
    } else {
    }
    %c0 = arith.constant 0 : index
    %c0_1 = arith.constant 0 : index
    %3 = vector.load %arg5[%c0, %c0_1] : memref<5x128xf32, #tpu.memory_space<vmem>>, vector<1x128xf32>
    %4 = vector.shape_cast %3 : vector<1x128xf32> to vector<1x128xf32>
    %5 = vector.broadcast %4 : vector<1x128xf32> to vector<8x128xf32>
    %c1 = arith.constant 1 : index
    %c0_2 = arith.constant 0 : index
    %6 = vector.load %arg5[%c1, %c0_2] : memref<5x128xf32, #tpu.memory_space<vmem>>, vector<1x128xf32>
    %7 = vector.shape_cast %6 : vector<1x128xf32> to vector<1x128xf32>
    %8 = vector.broadcast %7 : vector<1x128xf32> to vector<8x128xf32>
    %c2 = arith.constant 2 : index
    %c0_3 = arith.constant 0 : index
    %9 = vector.load %arg5[%c2, %c0_3] : memref<5x128xf32, #tpu.memory_space<vmem>>, vector<1x128xf32>
    %10 = vector.shape_cast %9 : vector<1x128xf32> to vector<1x128xf32>
    %11 = vector.broadcast %10 : vector<1x128xf32> to vector<8x128xf32>
    %c3 = arith.constant 3 : index
    %c0_4 = arith.constant 0 : index
    %12 = vector.load %arg5[%c3, %c0_4] : memref<5x128xf32, #tpu.memory_space<vmem>>, vector<1x128xf32>
    %13 = vector.shape_cast %12 : vector<1x128xf32> to vector<1x128xf32>
    %14 = vector.broadcast %13 : vector<1x128xf32> to vector<8x128xf32>
    %c4 = arith.constant 4 : index
    %c0_5 = arith.constant 0 : index
    %15 = vector.load %arg5[%c4, %c0_5] : memref<5x128xf32, #tpu.memory_space<vmem>>, vector<1x128xf32>
    %16 = vector.shape_cast %15 : vector<1x128xf32> to vector<1x128xf32>
    %17 = vector.broadcast %16 : vector<1x128xf32> to vector<8x128xf32>
    %c0_6 = arith.constant 0 : index
    %c0_7 = arith.constant 0 : index
    %c0_8 = arith.constant 0 : index
    %18 = vector.load %arg1[%c0_6, %c0_7, %c0_8] : memref<8x8x128xf32, #tpu.memory_space<vmem>>, vector<8x8x128xf32>
    %19 = vector.shape_cast %18 : vector<8x8x128xf32> to vector<64x128xf32>
    %c0_9 = arith.constant 0 : index
    %c0_10 = arith.constant 0 : index
    %20 = vector.load %arg2[%c0_9, %c0_10] : memref<128x128xf32, #tpu.memory_space<vmem>>, vector<128x128xf32>
    %cst = arith.constant dense<0.000000e+00> : vector<64x128xf32>
    %21 = tpu.matmul %19, %20, %cst {dimension_numbers = #tpu.dot_dimension_numbers<[1], [0], [0], [1], [0, 0, 1, 1], [], []>} : vector<64x128xf32>, vector<128x128xf32>, vector<64x128xf32> -> vector<64x128xf32>
    %c0_11 = arith.constant 0 : index
    %c0_12 = arith.constant 0 : index
    %22 = vector.load %arg7[%c0_11, %c0_12] : memref<8x128xf32, #tpu.memory_space<vmem>>, vector<8x128xf32>
    %c0_13 = arith.constant 0 : index
    %c0_14 = arith.constant 0 : index
    %23 = vector.load %arg8[%c0_13, %c0_14] : memref<8x128xf32, #tpu.memory_space<vmem>>, vector<8x128xf32>
    %c0_15 = arith.constant 0 : index
    %c0_16 = arith.constant 0 : index
    %24 = vector.load %arg9[%c0_15, %c0_16] : memref<8x128xf32, #tpu.memory_space<vmem>>, vector<8x128xf32>
    %25 = vector.extract_strided_slice %21 {offsets = [0, 0], sizes = [8, 128], strides = [1, 1]} : vector<64x128xf32> to vector<8x128xf32>
    %26 = arith.mulf %22, %8 : vector<8x128xf32>
    %27 = arith.addf %26, %25 : vector<8x128xf32>
    %28 = arith.cmpf ogt, %27, %5 : vector<8x128xf32>
    %29 = arith.extui %28 : vector<8x128xi1> to vector<8x128xi32>
    %30 = arith.sitofp %29 : vector<8x128xi32> to vector<8x128xf32>
    %cst_17 = arith.constant 0.000000e+00 : f32
    %31 = vector.broadcast %cst_17 : f32 to vector<8x128xf32>
    %32 = arith.select %28, %31, %27 : vector<8x128xi1>, vector<8x128xf32>
    %c0_18 = arith.constant 0 : index
    %c0_19 = arith.constant 0 : index
    %33 = vector.load %arg3[%c0_18, %c0_19] : memref<128x128xf32, #tpu.memory_space<vmem>>, vector<128x128xf32>
    %cst_20 = arith.constant dense<0.000000e+00> : vector<8x128xf32>
    %34 = tpu.matmul %30, %33, %cst_20 {dimension_numbers = #tpu.dot_dimension_numbers<[1], [0], [0], [1], [0, 0, 1, 1], [], []>} : vector<8x128xf32>, vector<128x128xf32>, vector<8x128xf32> -> vector<8x128xf32>
    %35 = arith.mulf %23, %14 : vector<8x128xf32>
    %36 = arith.addf %35, %34 : vector<8x128xf32>
    %37 = arith.cmpf ogt, %36, %11 : vector<8x128xf32>
    %38 = arith.extui %37 : vector<8x128xi1> to vector<8x128xi32>
    %39 = arith.sitofp %38 : vector<8x128xi32> to vector<8x128xf32>
    %cst_21 = arith.constant 0.000000e+00 : f32
    %40 = vector.broadcast %cst_21 : f32 to vector<8x128xf32>
    %41 = arith.select %37, %40, %36 : vector<8x128xi1>, vector<8x128xf32>
    %c0_22 = arith.constant 0 : index
    %c0_23 = arith.constant 0 : index
    %42 = vector.load %arg4[%c0_22, %c0_23] : memref<128x128xf32, #tpu.memory_space<vmem>>, vector<128x128xf32>
    %cst_24 = arith.constant dense<0.000000e+00> : vector<8x128xf32>
    %43 = tpu.matmul %39, %42, %cst_24 {dimension_numbers = #tpu.dot_dimension_numbers<[1], [0], [0], [1], [0, 0, 1, 1], [], []>} : vector<8x128xf32>, vector<128x128xf32>, vector<8x128xf32> -> vector<8x128xf32>
    %44 = arith.mulf %24, %17 : vector<8x128xf32>
    %45 = arith.addf %44, %43 : vector<8x128xf32>
    %c0_25 = arith.constant 0 : index
    %c0_26 = arith.constant 0 : index
    %c0_27 = arith.constant 0 : index
    %46 = vector.load %arg6[%c0_25, %c0_26, %c0_27] : memref<8x8x128xf32, #tpu.memory_space<vmem>>, vector<1x8x128xf32>
    %47 = vector.shape_cast %46 : vector<1x8x128xf32> to vector<8x128xf32>
    %48 = vector.shape_cast %45 : vector<8x128xf32> to vector<1x8x128xf32>
    tpu.vector_store %arg6[%c0_25, %c0_26, %c0_27], %48 {strides = array<i32>} : memref<8x8x128xf32, #tpu.memory_space<vmem>>, vector<1x8x128xf32>,
    %49 = vector.extract_strided_slice %21 {offsets = [8, 0], sizes = [8, 128], strides = [1, 1]} : vector<64x128xf32> to vector<8x128xf32>
    %50 = arith.mulf %32, %8 : vector<8x128xf32>
    %51 = arith.addf %50, %49 : vector<8x128xf32>
    %52 = arith.cmpf ogt, %51, %5 : vector<8x128xf32>
    %53 = arith.extui %52 : vector<8x128xi1> to vector<8x128xi32>
    %54 = arith.sitofp %53 : vector<8x128xi32> to vector<8x128xf32>
    %cst_28 = arith.constant 0.000000e+00 : f32
    %55 = vector.broadcast %cst_28 : f32 to vector<8x128xf32>
    %56 = arith.select %52, %55, %51 : vector<8x128xi1>, vector<8x128xf32>
    %c0_29 = arith.constant 0 : index
    %c0_30 = arith.constant 0 : index
    %57 = vector.load %arg3[%c0_29, %c0_30] : memref<128x128xf32, #tpu.memory_space<vmem>>, vector<128x128xf32>
    %cst_31 = arith.constant dense<0.000000e+00> : vector<8x128xf32>
    %58 = tpu.matmul %54, %57, %cst_31 {dimension_numbers = #tpu.dot_dimension_numbers<[1], [0], [0], [1], [0, 0, 1, 1], [], []>} : vector<8x128xf32>, vector<128x128xf32>, vector<8x128xf32> -> vector<8x128xf32>
    %59 = arith.mulf %41, %14 : vector<8x128xf32>
    %60 = arith.addf %59, %58 : vector<8x128xf32>
    %61 = arith.cmpf ogt, %60, %11 : vector<8x128xf32>
    %62 = arith.extui %61 : vector<8x128xi1> to vector<8x128xi32>
    %63 = arith.sitofp %62 : vector<8x128xi32> to vector<8x128xf32>
    %cst_32 = arith.constant 0.000000e+00 : f32
    %64 = vector.broadcast %cst_32 : f32 to vector<8x128xf32>
    %65 = arith.select %61, %64, %60 : vector<8x128xi1>, vector<8x128xf32>
    %c0_33 = arith.constant 0 : index
    %c0_34 = arith.constant 0 : index
    %66 = vector.load %arg4[%c0_33, %c0_34] : memref<128x128xf32, #tpu.memory_space<vmem>>, vector<128x128xf32>
    %cst_35 = arith.constant dense<0.000000e+00> : vector<8x128xf32>
    %67 = tpu.matmul %63, %66, %cst_35 {dimension_numbers = #tpu.dot_dimension_numbers<[1], [0], [0], [1], [0, 0, 1, 1], [], []>} : vector<8x128xf32>, vector<128x128xf32>, vector<8x128xf32> -> vector<8x128xf32>
    %68 = arith.mulf %45, %17 : vector<8x128xf32>
    %69 = arith.addf %68, %67 : vector<8x128xf32>
    %c1_36 = arith.constant 1 : index
    %c0_37 = arith.constant 0 : index
    %c0_38 = arith.constant 0 : index
    %70 = vector.load %arg6[%c1_36, %c0_37, %c0_38] : memref<8x8x128xf32, #tpu.memory_space<vmem>>, vector<1x8x128xf32>
    %71 = vector.shape_cast %70 : vector<1x8x128xf32> to vector<8x128xf32>
    %72 = vector.shape_cast %69 : vector<8x128xf32> to vector<1x8x128xf32>
    tpu.vector_store %arg6[%c1_36, %c0_37, %c0_38], %72 {strides = array<i32>} : memref<8x8x128xf32, #tpu.memory_space<vmem>>, vector<1x8x128xf32>,
    %73 = vector.extract_strided_slice %21 {offsets = [16, 0], sizes = [8, 128], strides = [1, 1]} : vector<64x128xf32> to vector<8x128xf32>
    %74 = arith.mulf %56, %8 : vector<8x128xf32>
    %75 = arith.addf %74, %73 : vector<8x128xf32>
    %76 = arith.cmpf ogt, %75, %5 : vector<8x128xf32>
    %77 = arith.extui %76 : vector<8x128xi1> to vector<8x128xi32>
    %78 = arith.sitofp %77 : vector<8x128xi32> to vector<8x128xf32>
    %cst_39 = arith.constant 0.000000e+00 : f32
    %79 = vector.broadcast %cst_39 : f32 to vector<8x128xf32>
    %80 = arith.select %76, %79, %75 : vector<8x128xi1>, vector<8x128xf32>
    %c0_40 = arith.constant 0 : index
    %c0_41 = arith.constant 0 : index
    %81 = vector.load %arg3[%c0_40, %c0_41] : memref<128x128xf32, #tpu.memory_space<vmem>>, vector<128x128xf32>
    %cst_42 = arith.constant dense<0.000000e+00> : vector<8x128xf32>
    %82 = tpu.matmul %78, %81, %cst_42 {dimension_numbers = #tpu.dot_dimension_numbers<[1], [0], [0], [1], [0, 0, 1, 1], [], []>} : vector<8x128xf32>, vector<128x128xf32>, vector<8x128xf32> -> vector<8x128xf32>
    %83 = arith.mulf %65, %14 : vector<8x128xf32>
    %84 = arith.addf %83, %82 : vector<8x128xf32>
    %85 = arith.cmpf ogt, %84, %11 : vector<8x128xf32>
    %86 = arith.extui %85 : vector<8x128xi1> to vector<8x128xi32>
    %87 = arith.sitofp %86 : vector<8x128xi32> to vector<8x128xf32>
    %cst_43 = arith.constant 0.000000e+00 : f32
    %88 = vector.broadcast %cst_43 : f32 to vector<8x128xf32>
    %89 = arith.select %85, %88, %84 : vector<8x128xi1>, vector<8x128xf32>
    %c0_44 = arith.constant 0 : index
    %c0_45 = arith.constant 0 : index
    %90 = vector.load %arg4[%c0_44, %c0_45] : memref<128x128xf32, #tpu.memory_space<vmem>>, vector<128x128xf32>
    %cst_46 = arith.constant dense<0.000000e+00> : vector<8x128xf32>
    %91 = tpu.matmul %87, %90, %cst_46 {dimension_numbers = #tpu.dot_dimension_numbers<[1], [0], [0], [1], [0, 0, 1, 1], [], []>} : vector<8x128xf32>, vector<128x128xf32>, vector<8x128xf32> -> vector<8x128xf32>
    %92 = arith.mulf %69, %17 : vector<8x128xf32>
    %93 = arith.addf %92, %91 : vector<8x128xf32>
    %c2_47 = arith.constant 2 : index
    %c0_48 = arith.constant 0 : index
    %c0_49 = arith.constant 0 : index
    %94 = vector.load %arg6[%c2_47, %c0_48, %c0_49] : memref<8x8x128xf32, #tpu.memory_space<vmem>>, vector<1x8x128xf32>
    %95 = vector.shape_cast %94 : vector<1x8x128xf32> to vector<8x128xf32>
    %96 = vector.shape_cast %93 : vector<8x128xf32> to vector<1x8x128xf32>
    tpu.vector_store %arg6[%c2_47, %c0_48, %c0_49], %96 {strides = array<i32>} : memref<8x8x128xf32, #tpu.memory_space<vmem>>, vector<1x8x128xf32>,
    %97 = vector.extract_strided_slice %21 {offsets = [24, 0], sizes = [8, 128], strides = [1, 1]} : vector<64x128xf32> to vector<8x128xf32>
    %98 = arith.mulf %80, %8 : vector<8x128xf32>
    %99 = arith.addf %98, %97 : vector<8x128xf32>
    %100 = arith.cmpf ogt, %99, %5 : vector<8x128xf32>
    %101 = arith.extui %100 : vector<8x128xi1> to vector<8x128xi32>
    %102 = arith.sitofp %101 : vector<8x128xi32> to vector<8x128xf32>
    %cst_50 = arith.constant 0.000000e+00 : f32
    %103 = vector.broadcast %cst_50 : f32 to vector<8x128xf32>
    %104 = arith.select %100, %103, %99 : vector<8x128xi1>, vector<8x128xf32>
    %c0_51 = arith.constant 0 : index
    %c0_52 = arith.constant 0 : index
    %105 = vector.load %arg3[%c0_51, %c0_52] : memref<128x128xf32, #tpu.memory_space<vmem>>, vector<128x128xf32>
    %cst_53 = arith.constant dense<0.000000e+00> : vector<8x128xf32>
    %106 = tpu.matmul %102, %105, %cst_53 {dimension_numbers = #tpu.dot_dimension_numbers<[1], [0], [0], [1], [0, 0, 1, 1], [], []>} : vector<8x128xf32>, vector<128x128xf32>, vector<8x128xf32> -> vector<8x128xf32>
    %107 = arith.mulf %89, %14 : vector<8x128xf32>
    %108 = arith.addf %107, %106 : vector<8x128xf32>
    %109 = arith.cmpf ogt, %108, %11 : vector<8x128xf32>
    %110 = arith.extui %109 : vector<8x128xi1> to vector<8x128xi32>
    %111 = arith.sitofp %110 : vector<8x128xi32> to vector<8x128xf32>
    %cst_54 = arith.constant 0.000000e+00 : f32
    %112 = vector.broadcast %cst_54 : f32 to vector<8x128xf32>
    %113 = arith.select %109, %112, %108 : vector<8x128xi1>, vector<8x128xf32>
    %c0_55 = arith.constant 0 : index
    %c0_56 = arith.constant 0 : index
    %114 = vector.load %arg4[%c0_55, %c0_56] : memref<128x128xf32, #tpu.memory_space<vmem>>, vector<128x128xf32>
    %cst_57 = arith.constant dense<0.000000e+00> : vector<8x128xf32>
    %115 = tpu.matmul %111, %114, %cst_57 {dimension_numbers = #tpu.dot_dimension_numbers<[1], [0], [0], [1], [0, 0, 1, 1], [], []>} : vector<8x128xf32>, vector<128x128xf32>, vector<8x128xf32> -> vector<8x128xf32>
    %116 = arith.mulf %93, %17 : vector<8x128xf32>
    %117 = arith.addf %116, %115 : vector<8x128xf32>
    %c3_58 = arith.constant 3 : index
    %c0_59 = arith.constant 0 : index
    %c0_60 = arith.constant 0 : index
    %118 = vector.load %arg6[%c3_58, %c0_59, %c0_60] : memref<8x8x128xf32, #tpu.memory_space<vmem>>, vector<1x8x128xf32>
    %119 = vector.shape_cast %118 : vector<1x8x128xf32> to vector<8x128xf32>
    %120 = vector.shape_cast %117 : vector<8x128xf32> to vector<1x8x128xf32>
    tpu.vector_store %arg6[%c3_58, %c0_59, %c0_60], %120 {strides = array<i32>} : memref<8x8x128xf32, #tpu.memory_space<vmem>>, vector<1x8x128xf32>,
    %121 = vector.extract_strided_slice %21 {offsets = [32, 0], sizes = [8, 128], strides = [1, 1]} : vector<64x128xf32> to vector<8x128xf32>
    %122 = arith.mulf %104, %8 : vector<8x128xf32>
    %123 = arith.addf %122, %121 : vector<8x128xf32>
    %124 = arith.cmpf ogt, %123, %5 : vector<8x128xf32>
    %125 = arith.extui %124 : vector<8x128xi1> to vector<8x128xi32>
    %126 = arith.sitofp %125 : vector<8x128xi32> to vector<8x128xf32>
    %cst_61 = arith.constant 0.000000e+00 : f32
    %127 = vector.broadcast %cst_61 : f32 to vector<8x128xf32>
    %128 = arith.select %124, %127, %123 : vector<8x128xi1>, vector<8x128xf32>
    %c0_62 = arith.constant 0 : index
    %c0_63 = arith.constant 0 : index
    %129 = vector.load %arg3[%c0_62, %c0_63] : memref<128x128xf32, #tpu.memory_space<vmem>>, vector<128x128xf32>
    %cst_64 = arith.constant dense<0.000000e+00> : vector<8x128xf32>
    %130 = tpu.matmul %126, %129, %cst_64 {dimension_numbers = #tpu.dot_dimension_numbers<[1], [0], [0], [1], [0, 0, 1, 1], [], []>} : vector<8x128xf32>, vector<128x128xf32>, vector<8x128xf32> -> vector<8x128xf32>
    %131 = arith.mulf %113, %14 : vector<8x128xf32>
    %132 = arith.addf %131, %130 : vector<8x128xf32>
    %133 = arith.cmpf ogt, %132, %11 : vector<8x128xf32>
    %134 = arith.extui %133 : vector<8x128xi1> to vector<8x128xi32>
    %135 = arith.sitofp %134 : vector<8x128xi32> to vector<8x128xf32>
    %cst_65 = arith.constant 0.000000e+00 : f32
    %136 = vector.broadcast %cst_65 : f32 to vector<8x128xf32>
    %137 = arith.select %133, %136, %132 : vector<8x128xi1>, vector<8x128xf32>
    %c0_66 = arith.constant 0 : index
    %c0_67 = arith.constant 0 : index
    %138 = vector.load %arg4[%c0_66, %c0_67] : memref<128x128xf32, #tpu.memory_space<vmem>>, vector<128x128xf32>
    %cst_68 = arith.constant dense<0.000000e+00> : vector<8x128xf32>
    %139 = tpu.matmul %135, %138, %cst_68 {dimension_numbers = #tpu.dot_dimension_numbers<[1], [0], [0], [1], [0, 0, 1, 1], [], []>} : vector<8x128xf32>, vector<128x128xf32>, vector<8x128xf32> -> vector<8x128xf32>
    %140 = arith.mulf %117, %17 : vector<8x128xf32>
    %141 = arith.addf %140, %139 : vector<8x128xf32>
    %c4_69 = arith.constant 4 : index
    %c0_70 = arith.constant 0 : index
    %c0_71 = arith.constant 0 : index
    %142 = vector.load %arg6[%c4_69, %c0_70, %c0_71] : memref<8x8x128xf32, #tpu.memory_space<vmem>>, vector<1x8x128xf32>
    %143 = vector.shape_cast %142 : vector<1x8x128xf32> to vector<8x128xf32>
    %144 = vector.shape_cast %141 : vector<8x128xf32> to vector<1x8x128xf32>
    tpu.vector_store %arg6[%c4_69, %c0_70, %c0_71], %144 {strides = array<i32>} : memref<8x8x128xf32, #tpu.memory_space<vmem>>, vector<1x8x128xf32>,
    %145 = vector.extract_strided_slice %21 {offsets = [40, 0], sizes = [8, 128], strides = [1, 1]} : vector<64x128xf32> to vector<8x128xf32>
    %146 = arith.mulf %128, %8 : vector<8x128xf32>
    %147 = arith.addf %146, %145 : vector<8x128xf32>
    %148 = arith.cmpf ogt, %147, %5 : vector<8x128xf32>
    %149 = arith.extui %148 : vector<8x128xi1> to vector<8x128xi32>
    %150 = arith.sitofp %149 : vector<8x128xi32> to vector<8x128xf32>
    %cst_72 = arith.constant 0.000000e+00 : f32
    %151 = vector.broadcast %cst_72 : f32 to vector<8x128xf32>
    %152 = arith.select %148, %151, %147 : vector<8x128xi1>, vector<8x128xf32>
    %c0_73 = arith.constant 0 : index
    %c0_74 = arith.constant 0 : index
    %153 = vector.load %arg3[%c0_73, %c0_74] : memref<128x128xf32, #tpu.memory_space<vmem>>, vector<128x128xf32>
    %cst_75 = arith.constant dense<0.000000e+00> : vector<8x128xf32>
    %154 = tpu.matmul %150, %153, %cst_75 {dimension_numbers = #tpu.dot_dimension_numbers<[1], [0], [0], [1], [0, 0, 1, 1], [], []>} : vector<8x128xf32>, vector<128x128xf32>, vector<8x128xf32> -> vector<8x128xf32>
    %155 = arith.mulf %137, %14 : vector<8x128xf32>
    %156 = arith.addf %155, %154 : vector<8x128xf32>
    %157 = arith.cmpf ogt, %156, %11 : vector<8x128xf32>
    %158 = arith.extui %157 : vector<8x128xi1> to vector<8x128xi32>
    %159 = arith.sitofp %158 : vector<8x128xi32> to vector<8x128xf32>
    %cst_76 = arith.constant 0.000000e+00 : f32
    %160 = vector.broadcast %cst_76 : f32 to vector<8x128xf32>
    %161 = arith.select %157, %160, %156 : vector<8x128xi1>, vector<8x128xf32>
    %c0_77 = arith.constant 0 : index
    %c0_78 = arith.constant 0 : index
    %162 = vector.load %arg4[%c0_77, %c0_78] : memref<128x128xf32, #tpu.memory_space<vmem>>, vector<128x128xf32>
    %cst_79 = arith.constant dense<0.000000e+00> : vector<8x128xf32>
    %163 = tpu.matmul %159, %162, %cst_79 {dimension_numbers = #tpu.dot_dimension_numbers<[1], [0], [0], [1], [0, 0, 1, 1], [], []>} : vector<8x128xf32>, vector<128x128xf32>, vector<8x128xf32> -> vector<8x128xf32>
    %164 = arith.mulf %141, %17 : vector<8x128xf32>
    %165 = arith.addf %164, %163 : vector<8x128xf32>
    %c5 = arith.constant 5 : index
    %c0_80 = arith.constant 0 : index
    %c0_81 = arith.constant 0 : index
    %166 = vector.load %arg6[%c5, %c0_80, %c0_81] : memref<8x8x128xf32, #tpu.memory_space<vmem>>, vector<1x8x128xf32>
    %167 = vector.shape_cast %166 : vector<1x8x128xf32> to vector<8x128xf32>
    %168 = vector.shape_cast %165 : vector<8x128xf32> to vector<1x8x128xf32>
    tpu.vector_store %arg6[%c5, %c0_80, %c0_81], %168 {strides = array<i32>} : memref<8x8x128xf32, #tpu.memory_space<vmem>>, vector<1x8x128xf32>,
    %169 = vector.extract_strided_slice %21 {offsets = [48, 0], sizes = [8, 128], strides = [1, 1]} : vector<64x128xf32> to vector<8x128xf32>
    %170 = arith.mulf %152, %8 : vector<8x128xf32>
    %171 = arith.addf %170, %169 : vector<8x128xf32>
    %172 = arith.cmpf ogt, %171, %5 : vector<8x128xf32>
    %173 = arith.extui %172 : vector<8x128xi1> to vector<8x128xi32>
    %174 = arith.sitofp %173 : vector<8x128xi32> to vector<8x128xf32>
    %cst_82 = arith.constant 0.000000e+00 : f32
    %175 = vector.broadcast %cst_82 : f32 to vector<8x128xf32>
    %176 = arith.select %172, %175, %171 : vector<8x128xi1>, vector<8x128xf32>
    %c0_83 = arith.constant 0 : index
    %c0_84 = arith.constant 0 : index
    %177 = vector.load %arg3[%c0_83, %c0_84] : memref<128x128xf32, #tpu.memory_space<vmem>>, vector<128x128xf32>
    %cst_85 = arith.constant dense<0.000000e+00> : vector<8x128xf32>
    %178 = tpu.matmul %174, %177, %cst_85 {dimension_numbers = #tpu.dot_dimension_numbers<[1], [0], [0], [1], [0, 0, 1, 1], [], []>} : vector<8x128xf32>, vector<128x128xf32>, vector<8x128xf32> -> vector<8x128xf32>
    %179 = arith.mulf %161, %14 : vector<8x128xf32>
    %180 = arith.addf %179, %178 : vector<8x128xf32>
    %181 = arith.cmpf ogt, %180, %11 : vector<8x128xf32>
    %182 = arith.extui %181 : vector<8x128xi1> to vector<8x128xi32>
    %183 = arith.sitofp %182 : vector<8x128xi32> to vector<8x128xf32>
    %cst_86 = arith.constant 0.000000e+00 : f32
    %184 = vector.broadcast %cst_86 : f32 to vector<8x128xf32>
    %185 = arith.select %181, %184, %180 : vector<8x128xi1>, vector<8x128xf32>
    %c0_87 = arith.constant 0 : index
    %c0_88 = arith.constant 0 : index
    %186 = vector.load %arg4[%c0_87, %c0_88] : memref<128x128xf32, #tpu.memory_space<vmem>>, vector<128x128xf32>
    %cst_89 = arith.constant dense<0.000000e+00> : vector<8x128xf32>
    %187 = tpu.matmul %183, %186, %cst_89 {dimension_numbers = #tpu.dot_dimension_numbers<[1], [0], [0], [1], [0, 0, 1, 1], [], []>} : vector<8x128xf32>, vector<128x128xf32>, vector<8x128xf32> -> vector<8x128xf32>
    %188 = arith.mulf %165, %17 : vector<8x128xf32>
    %189 = arith.addf %188, %187 : vector<8x128xf32>
    %c6 = arith.constant 6 : index
    %c0_90 = arith.constant 0 : index
    %c0_91 = arith.constant 0 : index
    %190 = vector.load %arg6[%c6, %c0_90, %c0_91] : memref<8x8x128xf32, #tpu.memory_space<vmem>>, vector<1x8x128xf32>
    %191 = vector.shape_cast %190 : vector<1x8x128xf32> to vector<8x128xf32>
    %192 = vector.shape_cast %189 : vector<8x128xf32> to vector<1x8x128xf32>
    tpu.vector_store %arg6[%c6, %c0_90, %c0_91], %192 {strides = array<i32>} : memref<8x8x128xf32, #tpu.memory_space<vmem>>, vector<1x8x128xf32>,
    %193 = vector.extract_strided_slice %21 {offsets = [56, 0], sizes = [8, 128], strides = [1, 1]} : vector<64x128xf32> to vector<8x128xf32>
    %194 = arith.mulf %176, %8 : vector<8x128xf32>
    %195 = arith.addf %194, %193 : vector<8x128xf32>
    %196 = arith.cmpf ogt, %195, %5 : vector<8x128xf32>
    %197 = arith.extui %196 : vector<8x128xi1> to vector<8x128xi32>
    %198 = arith.sitofp %197 : vector<8x128xi32> to vector<8x128xf32>
    %cst_92 = arith.constant 0.000000e+00 : f32
    %199 = vector.broadcast %cst_92 : f32 to vector<8x128xf32>
    %200 = arith.select %196, %199, %195 : vector<8x128xi1>, vector<8x128xf32>
    %c0_93 = arith.constant 0 : index
    %c0_94 = arith.constant 0 : index
    %201 = vector.load %arg3[%c0_93, %c0_94] : memref<128x128xf32, #tpu.memory_space<vmem>>, vector<128x128xf32>
    %cst_95 = arith.constant dense<0.000000e+00> : vector<8x128xf32>
    %202 = tpu.matmul %198, %201, %cst_95 {dimension_numbers = #tpu.dot_dimension_numbers<[1], [0], [0], [1], [0, 0, 1, 1], [], []>} : vector<8x128xf32>, vector<128x128xf32>, vector<8x128xf32> -> vector<8x128xf32>
    %203 = arith.mulf %185, %14 : vector<8x128xf32>
    %204 = arith.addf %203, %202 : vector<8x128xf32>
    %205 = arith.cmpf ogt, %204, %11 : vector<8x128xf32>
    %206 = arith.extui %205 : vector<8x128xi1> to vector<8x128xi32>
    %207 = arith.sitofp %206 : vector<8x128xi32> to vector<8x128xf32>
    %cst_96 = arith.constant 0.000000e+00 : f32
    %208 = vector.broadcast %cst_96 : f32 to vector<8x128xf32>
    %209 = arith.select %205, %208, %204 : vector<8x128xi1>, vector<8x128xf32>
    %c0_97 = arith.constant 0 : index
    %c0_98 = arith.constant 0 : index
    %210 = vector.load %arg4[%c0_97, %c0_98] : memref<128x128xf32, #tpu.memory_space<vmem>>, vector<128x128xf32>
    %cst_99 = arith.constant dense<0.000000e+00> : vector<8x128xf32>
    %211 = tpu.matmul %207, %210, %cst_99 {dimension_numbers = #tpu.dot_dimension_numbers<[1], [0], [0], [1], [0, 0, 1, 1], [], []>} : vector<8x128xf32>, vector<128x128xf32>, vector<8x128xf32> -> vector<8x128xf32>
    %212 = arith.mulf %189, %17 : vector<8x128xf32>
    %213 = arith.addf %212, %211 : vector<8x128xf32>
    %c7 = arith.constant 7 : index
    %c0_100 = arith.constant 0 : index
    %c0_101 = arith.constant 0 : index
    %214 = vector.load %arg6[%c7, %c0_100, %c0_101] : memref<8x8x128xf32, #tpu.memory_space<vmem>>, vector<1x8x128xf32>
    %215 = vector.shape_cast %214 : vector<1x8x128xf32> to vector<8x128xf32>
    %216 = vector.shape_cast %213 : vector<8x128xf32> to vector<1x8x128xf32>
    tpu.vector_store %arg6[%c7, %c0_100, %c0_101], %216 {strides = array<i32>} : memref<8x8x128xf32, #tpu.memory_space<vmem>>, vector<1x8x128xf32>,
    %c0_102 = arith.constant 0 : index
    %c0_103 = arith.constant 0 : index
    %217 = vector.load %arg7[%c0_102, %c0_103] : memref<8x128xf32, #tpu.memory_space<vmem>>, vector<8x128xf32>
    tpu.vector_store %arg7[%c0_102, %c0_103], %200 {strides = array<i32>} : memref<8x128xf32, #tpu.memory_space<vmem>>, vector<8x128xf32>,
    %c0_104 = arith.constant 0 : index
    %c0_105 = arith.constant 0 : index
    %218 = vector.load %arg8[%c0_104, %c0_105] : memref<8x128xf32, #tpu.memory_space<vmem>>, vector<8x128xf32>
    tpu.vector_store %arg8[%c0_104, %c0_105], %209 {strides = array<i32>} : memref<8x128xf32, #tpu.memory_space<vmem>>, vector<8x128xf32>,
    %c0_106 = arith.constant 0 : index
    %c0_107 = arith.constant 0 : index
    %219 = vector.load %arg9[%c0_106, %c0_107] : memref<8x128xf32, #tpu.memory_space<vmem>>, vector<8x128xf32>
    tpu.vector_store %arg9[%c0_106, %c0_107], %213 {strides = array<i32>} : memref<8x128xf32, #tpu.memory_space<vmem>>, vector<8x128xf32>,
    return
  }
  func.func @transform_0(%arg0: i32) -> (i32, i32, i32) {
    %c0_i32 = arith.constant 0 : i32
    %c0_i32_0 = arith.constant 0 : i32
    %c0_i32_1 = arith.constant 0 : i32
    return %arg0, %c0_i32, %c0_i32_0 : i32, i32, i32
  }
  func.func @transform_1(%arg0: i32) -> (i32, i32) {
    %c0_i32 = arith.constant 0 : i32
    %c0_i32_0 = arith.constant 0 : i32
    %c0_i32_1 = arith.constant 0 : i32
    return %c0_i32, %c0_i32_0 : i32, i32
  }
  func.func @transform_2(%arg0: i32) -> (i32, i32) {
    %c0_i32 = arith.constant 0 : i32
    %c0_i32_0 = arith.constant 0 : i32
    %c0_i32_1 = arith.constant 0 : i32
    return %c0_i32, %c0_i32_0 : i32, i32
  }
  func.func @transform_3(%arg0: i32) -> (i32, i32) {
    %c0_i32 = arith.constant 0 : i32
    %c0_i32_0 = arith.constant 0 : i32
    %c0_i32_1 = arith.constant 0 : i32
    return %c0_i32, %c0_i32_0 : i32, i32
  }
  func.func @transform_4(%arg0: i32) -> (i32, i32) {
    %c0_i32 = arith.constant 0 : i32
    %c0_i32_0 = arith.constant 0 : i32
    %c0_i32_1 = arith.constant 0 : i32
    return %c0_i32, %c0_i32_0 : i32, i32
  }
  func.func @transform_5(%arg0: i32) -> (i32, i32, i32) {
    %c0_i32 = arith.constant 0 : i32
    %c0_i32_0 = arith.constant 0 : i32
    %c0_i32_1 = arith.constant 0 : i32
    return %arg0, %c0_i32, %c0_i32_0 : i32, i32, i32
  }
}

</mosaic_0001>

<llo_original>
// kernel: _lambda_.1
$region0: #{_lambda_.1}
  #allocation0 [shape = 'u32[]', space=smem, size = 0x4, offset = 0x4, fixed_abs, tag = 'smem constant byte address 0x4 - core index']
  #allocation1 [shape = 'u32[144,128]{1,0:T(1,128)}', space=vmem, size = 0x12000, scoped, tag = 'internal scratch']
  #allocation2 [shape = 'f32[8,128]{1,0:T(8,128)}', space=vmem, size = 0x1000, scoped, tag = 'scratch operand']
  #allocation3 [shape = 'f32[8,128]{1,0:T(8,128)}', space=vmem, size = 0x1000, scoped, tag = 'scratch operand']
  #allocation4 [shape = 'f32[8,128]{1,0:T(8,128)}', space=vmem, size = 0x1000, scoped, tag = 'scratch operand']
  %s0 = inlined_call_operand.vmem [shape: f32[8,8,128], index: 0, kind: input, shape index: {}]
  %s1 = inlined_call_operand.hbm [shape: f32[128,128], index: 1, kind: input, shape index: {}]
  %s2 = inlined_call_operand.hbm [shape: f32[128,128], index: 2, kind: input, shape index: {}]
  %s3 = inlined_call_operand.hbm [shape: f32[128,128], index: 3, kind: input, shape index: {}]
  %s4 = inlined_call_operand.vmem [shape: f32[5,128], index: 4, kind: input, shape index: {}]
  %s5 = inlined_call_operand.vmem [shape: f32[8,8,128], index: 5, kind: output, shape index: {}]
  %s6 = sld [smem:[#allocation0]]
  $region46: #{_lambda_.1} parent=0
    _
  %s8 = ssub.s32 1, %s6
  %s9 = scalar_select 0, %s8, %s6
  $region1: #{_lambda_.1} parent=0
    #allocation5 [shape = 'u8[65536]{0}', space=vmem, size = 0x10000, scoped, tag = 'input window, operand 1, single buffered']
    #allocation6 [shape = 's32[1]{0}', space=sflag, size = 0x4, scoped, tag = 'scoped memory for _lambda_.1']
    #allocation7 [shape = 'u8[65536]{0}', space=vmem, size = 0x10000, scoped, tag = 'input window, operand 2, single buffered']
    #allocation8 [shape = 's32[1]{0}', space=sflag, size = 0x4, scoped, tag = 'scoped memory for _lambda_.1']
    #allocation9 [shape = 'u8[65536]{0}', space=vmem, size = 0x10000, scoped, tag = 'input window, operand 3, single buffered']
    %10 = vsyncpa [#allocation6], 0
    %11 = vsyncpa [#allocation8], 0
    // Predicated region
    $region2: #{_lambda_.1} parent=1 // pred_check
      _
    $region3: #{_lambda_.1} parent=1 // pred_check_branch
      %13 = sbr.rel (0) target = $region5
    $region4: #{_lambda_.1} parent=1 // pred_region
      _
    $region5: #{_lambda_.1} parent=1 // pred_fallthru
      _
    // Predicated region
    $region6: #{_lambda_.1} parent=1 // pred_check
      _
    $region7: #{_lambda_.1} parent=1 // pred_check_branch
      %15 = sbr.rel (0) target = $region9
    $region8: #{_lambda_.1} parent=1 // pred_region
      %s17 = ssub.s32 2048, 2048
      %18 = vsyncadd [#allocation6], %s17
      %s19 = sshll.u32 [#allocation5], 4
      %s20 = int_to_ptr.vmem [resolvable:$true] %s19
      %25 = dma.hbm_to_vmem [thread:$0]  %s1, 2048, %s20, [#allocation6], 128, 128, 8
    $region9: #{_lambda_.1} parent=1 // pred_fallthru
      _
    // Predicated region
    $region10: #{_lambda_.1} parent=1 // pred_check
      _
    $region11: #{_lambda_.1} parent=1 // pred_check_branch
      %27 = sbr.rel (0) target = $region13
    $region12: #{_lambda_.1} parent=1 // pred_region
      %s29 = ssub.s32 2048, 2048
      %30 = vsyncadd [#allocation8], %s29
      %s31 = sshll.u32 [#allocation7], 4
      %s32 = int_to_ptr.vmem [resolvable:$true] %s31
      %37 = dma.hbm_to_vmem [thread:$0]  %s2, 2048, %s32, [#allocation8], 128, 128, 8
    $region13: #{_lambda_.1} parent=1 // pred_fallthru
      _
    // Predicated region
    $region14: #{_lambda_.1} parent=1 // pred_check
      _
    $region15: #{_lambda_.1} parent=1 // pred_check_branch
      %39 = sbr.rel (0) target = $region17
    $region16: #{_lambda_.1} parent=1 // pred_region
      %s41 = ssub.s32 2048, 2048
      %42 = vsyncadd [#allocation8], %s41
      %s43 = sshll.u32 [#allocation9], 4
      %s44 = int_to_ptr.vmem [resolvable:$true] %s43
      %49 = dma.hbm_to_vmem [thread:$0]  %s3, 2048, %s44, [#allocation8], 128, 128, 8
    $region17: #{_lambda_.1} parent=1 // pred_fallthru
      _
    // Predicated region
    $region18: #{_lambda_.1} parent=1 // pred_check
      _
    $region19: #{_lambda_.1} parent=1 // pred_check_branch
      %51 = sbr.rel (0) target = $region21
    $region20: #{_lambda_.1} parent=1 // pred_region
      _
    $region21: #{_lambda_.1} parent=1 // pred_fallthru
      _
    // Predicated region
    $region22: #{_lambda_.1} parent=1 // pred_check
      _
    $region23: #{_lambda_.1} parent=1 // pred_check_branch
      %53 = sbr.rel (0) target = $region25
    $region24: #{_lambda_.1} parent=1 // pred_region
      %54 = dma.done [#allocation6], 2048
    $region25: #{_lambda_.1} parent=1 // pred_fallthru
      _
    // Predicated region
    $region26: #{_lambda_.1} parent=1 // pred_check
      _
    $region27: #{_lambda_.1} parent=1 // pred_check_branch
      %56 = sbr.rel (0) target = $region29
    $region28: #{_lambda_.1} parent=1 // pred_region
      %57 = dma.done [#allocation8], 2048
    $region29: #{_lambda_.1} parent=1 // pred_fallthru
      _
    // Predicated region
    $region30: #{_lambda_.1} parent=1 // pred_check
      _
    $region31: #{_lambda_.1} parent=1 // pred_check_branch
      %59 = sbr.rel (0) target = $region33
    $region32: #{_lambda_.1} parent=1 // pred_region
      %60 = dma.done [#allocation8], 2048
    $region33: #{_lambda_.1} parent=1 // pred_fallthru
      _
    %p61 = scmp.eq.s32.totalorder 0, 0
    // Predicated region
    $region34: #{_lambda_.1} parent=1 // pred_check
      %p62 = pneg %p61
    $region35: #{_lambda_.1} parent=1 // pred_check_branch
      %64 = sbr.rel (%p62) target = $region37
    $region36: #{_lambda_.1} parent=1 // pred_region
      %65 = vst [vmem:[#allocation2] sm:$0xff] 0.0
      %66 = vst [vmem:[#allocation3] sm:$0xff] 0.0
      %67 = vst [vmem:[#allocation4] sm:$0xff] 0.0
    $region37: #{_lambda_.1} parent=1 // pred_fallthru
      _
    %v68 = vld [vmem:[%s4] sm:$0x1]
    %v69 = vlaneseq
    %v70 = vshrl.u32 %v69, 7
    %v71 = vsub.s32 0, %v70
    %v72 = vrot.slane %v68, %v71
    %v73 = vld [vmem:[%s4 + $0x1] sm:$0x1]
    %v74 = vlaneseq
    %v75 = vshrl.u32 %v74, 7
    %v76 = vsub.s32 0, %v75
    %v77 = vrot.slane %v73, %v76
    %v78 = vld [vmem:[%s4 + $0x2] sm:$0x1]
    %v79 = vlaneseq
    %v80 = vshrl.u32 %v79, 7
    %v81 = vsub.s32 0, %v80
    %v82 = vrot.slane %v78, %v81
    %v83 = vld [vmem:[%s4 + $0x3] sm:$0x1]
    %v84 = vlaneseq
    %v85 = vshrl.u32 %v84, 7
    %v86 = vsub.s32 0, %v85
    %v87 = vrot.slane %v83, %v86
    %v88 = vld [vmem:[%s4 + $0x4] sm:$0x1]
    %v89 = vlaneseq
    %v90 = vshrl.u32 %v89, 7
    %v91 = vsub.s32 0, %v90
    %v92 = vrot.slane %v88, %v91
    %v93 = vld [vmem:[%s0] sm:$0xff]
    %v94 = vld [vmem:[%s0 + $0x8] sm:$0xff]
    %v95 = vld [vmem:[%s0 + $0x10] sm:$0xff]
    %v96 = vld [vmem:[%s0 + $0x18] sm:$0xff]
    %v97 = vld [vmem:[%s0 + $0x20] sm:$0xff]
    %v98 = vld [vmem:[%s0 + $0x28] sm:$0xff]
    %v99 = vld [vmem:[%s0 + $0x30] sm:$0xff]
    %v100 = vld [vmem:[%s0 + $0x38] sm:$0xff]
    %v101 = vld [vmem:[#allocation5] sm:$0xff]
    %v102 = vld [vmem:[#allocation5 + $0x8] sm:$0xff]
    %v103 = vld [vmem:[#allocation5 + $0x10] sm:$0xff]
    %v104 = vld [vmem:[#allocation5 + $0x18] sm:$0xff]
    %v105 = vld [vmem:[#allocation5 + $0x20] sm:$0xff]
    %v106 = vld [vmem:[#allocation5 + $0x28] sm:$0xff]
    %v107 = vld [vmem:[#allocation5 + $0x30] sm:$0xff]
    %v108 = vld [vmem:[#allocation5 + $0x38] sm:$0xff]
    %v109 = vld [vmem:[#allocation5 + $0x40] sm:$0xff]
    %v110 = vld [vmem:[#allocation5 + $0x48] sm:$0xff]
    %v111 = vld [vmem:[#allocation5 + $0x50] sm:$0xff]
    %v112 = vld [vmem:[#allocation5 + $0x58] sm:$0xff]
    %v113 = vld [vmem:[#allocation5 + $0x60] sm:$0xff]
    %v114 = vld [vmem:[#allocation5 + $0x68] sm:$0xff]
    %v115 = vld [vmem:[#allocation5 + $0x70] sm:$0xff]
    %v116 = vld [vmem:[#allocation5 + $0x78] sm:$0xff]
    %117 = vmatprep.subr.mxu0 0.0
    %118 = vmatpush1.msra.mxu0 %v101
    %119 = vmatprep.subr.mxu0 0.0
    %120 = vmatpush1.msra.mxu0 %v102
    %121 = vmatprep.subr.mxu0 0.0
    %122 = vmatpush1.msra.mxu0 %v103
    %123 = vmatprep.subr.mxu0 0.0
    %124 = vmatpush1.msra.mxu0 %v104
    %125 = vmatprep.subr.mxu0 0.0
    %126 = vmatpush1.msra.mxu0 %v105
    %127 = vmatprep.subr.mxu0 0.0
    %128 = vmatpush1.msra.mxu0 %v106
    %129 = vmatprep.subr.mxu0 0.0
    %130 = vmatpush1.msra.mxu0 %v107
    %131 = vmatprep.subr.mxu0 0.0
    %132 = vmatpush1.msra.mxu0 %v108
    %133 = vmatprep.subr.mxu0 0.0
    %134 = vmatpush1.msra.mxu0 %v109
    %135 = vmatprep.subr.mxu0 0.0
    %136 = vmatpush1.msra.mxu0 %v110
    %137 = vmatprep.subr.mxu0 0.0
    %138 = vmatpush1.msra.mxu0 %v111
    %139 = vmatprep.subr.mxu0 0.0
    %140 = vmatpush1.msra.mxu0 %v112
    %141 = vmatprep.subr.mxu0 0.0
    %142 = vmatpush1.msra.mxu0 %v113
    %143 = vmatprep.subr.mxu0 0.0
    %144 = vmatpush1.msra.mxu0 %v114
    %145 = vmatprep.subr.mxu0 0.0
    %146 = vmatpush1.msra.mxu0 %v115
    %147 = vmatprep.subr.mxu0 0.0
    %148 = vmatpush1.msra.mxu0 %v116
    %149 = vmatprep.subr.mxu0 0.0
    %150 = vmatpush1.msra.mxu0 0.0
    %151 = vmatprep.subr.mxu0 0.0
    %152 = vmatpush1.msra.mxu0 0.0
    %153 = vmatprep.subr.mxu0 0.0
    %154 = vmatpush1.msra.mxu0 0.0
    %155 = vmatprep.subr.mxu0 0.0
    %156 = vmatpush1.msra.mxu0 0.0
    %157 = vmatprep.subr.mxu0 0.0
    %158 = vmatpush1.msra.mxu0 0.0
    %159 = vmatprep.subr.mxu0 0.0
    %160 = vmatpush1.msra.mxu0 0.0
    %161 = vmatprep.subr.mxu0 0.0
    %162 = vmatpush1.msra.mxu0 0.0
    %163 = vmatprep.subr.mxu0 0.0
    %164 = vmatpush1.msra.mxu0 0.0
    %165 = vmatprep.subr.mxu0 0.0
    %166 = vmatpush1.msra.mxu0 0.0
    %167 = vmatprep.subr.mxu0 0.0
    %168 = vmatpush1.msra.mxu0 0.0
    %169 = vmatprep.subr.mxu0 0.0
    %170 = vmatpush1.msra.mxu0 0.0
    %171 = vmatprep.subr.mxu0 0.0
    %172 = vmatpush1.msra.mxu0 0.0
    %173 = vmatprep.subr.mxu0 0.0
    %174 = vmatpush1.msra.mxu0 0.0
    %175 = vmatprep.subr.mxu0 0.0
    %176 = vmatpush1.msra.mxu0 0.0
    %177 = vmatprep.subr.mxu0 0.0
    %178 = vmatpush1.msra.mxu0 0.0
    %179 = vmatprep.subr.mxu0 0.0
    %180 = vmatpush1.msra.mxu0 0.0
    %181 = vmatprep.mubr.f32.mxu0 0.0
    %182 = vmatmul.mubr.f32.gmra.mrb[0].mxu0 %v93
    %v183 = vpop.f32.mrb[0].mxu0
    %v184 = vadd.f32 0.0, %v183
    %v185 = vpop.f32.mrb[0].mxu0
    %186 = vmatprep.mubr.f32.mxu0 0.0
    %187 = vmatmul.mubr.f32.gmra.mrb[0].mxu0 %v94
    %v188 = vpop.f32.mrb[0].mxu0
    %v189 = vadd.f32 0.0, %v188
    %v190 = vpop.f32.mrb[0].mxu0
    %191 = vmatprep.mubr.f32.mxu0 0.0
    %192 = vmatmul.mubr.f32.gmra.mrb[0].mxu0 %v95
    %v193 = vpop.f32.mrb[0].mxu0
    %v194 = vadd.f32 0.0, %v193
    %v195 = vpop.f32.mrb[0].mxu0
    %196 = vmatprep.mubr.f32.mxu0 0.0
    %197 = vmatmul.mubr.f32.gmra.mrb[0].mxu0 %v96
    %v198 = vpop.f32.mrb[0].mxu0
    %v199 = vadd.f32 0.0, %v198
    %v200 = vpop.f32.mrb[0].mxu0
    %201 = vmatprep.mubr.f32.mxu0 0.0
    %202 = vmatmul.mubr.f32.gmra.mrb[0].mxu0 %v97
    %v203 = vpop.f32.mrb[0].mxu0
    %v204 = vadd.f32 0.0, %v203
    %v205 = vpop.f32.mrb[0].mxu0
    %206 = vmatprep.mubr.f32.mxu0 0.0
    %207 = vmatmul.mubr.f32.gmra.mrb[0].mxu0 %v98
    %v208 = vpop.f32.mrb[0].mxu0
    %v209 = vadd.f32 0.0, %v208
    %v210 = vpop.f32.mrb[0].mxu0
    %211 = vmatprep.mubr.f32.mxu0 0.0
    %212 = vmatmul.mubr.f32.gmra.mrb[0].mxu0 %v99
    %v213 = vpop.f32.mrb[0].mxu0
    %v214 = vadd.f32 0.0, %v213
    %v215 = vpop.f32.mrb[0].mxu0
    %216 = vmatprep.mubr.f32.mxu0 0.0
    %217 = vmatmul.mubr.f32.gmra.mrb[0].mxu0 %v100
    %v218 = vpop.f32.mrb[0].mxu0
    %v219 = vadd.f32 0.0, %v218
    %v220 = vpop.f32.mrb[0].mxu0
    %221 = vdwg.mxu0
    %v222 = vld [vmem:[#allocation2] sm:$0xff]
    %v223 = vld [vmem:[#allocation3] sm:$0xff]
    %v224 = vld [vmem:[#allocation4] sm:$0xff]
    %v225 = vmul.f32 %v222, %v77
    %v226 = vadd.f32 %v225, %v184
    %vm227 = vcmp.gt.f32.partialorder %v226, %v72
    %v228 = vsel %vm227, 1, 0
    %v229 = vcvt.s32.f32 %v228
    %v230 = vsel %vm227, 0.0, %v226
    %v231 = vld [vmem:[#allocation7] sm:$0xff]
    %v232 = vld [vmem:[#allocation7 + $0x8] sm:$0xff]
    %v233 = vld [vmem:[#allocation7 + $0x10] sm:$0xff]
    %v234 = vld [vmem:[#allocation7 + $0x18] sm:$0xff]
    %v235 = vld [vmem:[#allocation7 + $0x20] sm:$0xff]
    %v236 = vld [vmem:[#allocation7 + $0x28] sm:$0xff]
    %v237 = vld [vmem:[#allocation7 + $0x30] sm:$0xff]
    %v238 = vld [vmem:[#allocation7 + $0x38] sm:$0xff]
    %v239 = vld [vmem:[#allocation7 + $0x40] sm:$0xff]
    %v240 = vld [vmem:[#allocation7 + $0x48] sm:$0xff]
    %v241 = vld [vmem:[#allocation7 + $0x50] sm:$0xff]
    %v242 = vld [vmem:[#allocation7 + $0x58] sm:$0xff]
    %v243 = vld [vmem:[#allocation7 + $0x60] sm:$0xff]
    %v244 = vld [vmem:[#allocation7 + $0x68] sm:$0xff]
    %v245 = vld [vmem:[#allocation7 + $0x70] sm:$0xff]
    %v246 = vld [vmem:[#allocation7 + $0x78] sm:$0xff]
    %247 = vmatprep.subr.mxu0 0.0
    %248 = vmatpush1.msra.mxu0 %v231
    %249 = vmatprep.subr.mxu0 0.0
    %250 = vmatpush1.msra.mxu0 %v232
    %251 = vmatprep.subr.mxu0 0.0
    %252 = vmatpush1.msra.mxu0 %v233
    %253 = vmatprep.subr.mxu0 0.0
    %254 = vmatpush1.msra.mxu0 %v234
    %255 = vmatprep.subr.mxu0 0.0
    %256 = vmatpush1.msra.mxu0 %v235
    %257 = vmatprep.subr.mxu0 0.0
    %258 = vmatpush1.msra.mxu0 %v236
    %259 = vmatprep.subr.mxu0 0.0
    %260 = vmatpush1.msra.mxu0 %v237
    %261 = vmatprep.subr.mxu0 0.0
    %262 = vmatpush1.msra.mxu0 %v238
    %263 = vmatprep.subr.mxu0 0.0
    %264 = vmatpush1.msra.mxu0 %v239
    %265 = vmatprep.subr.mxu0 0.0
    %266 = vmatpush1.msra.mxu0 %v240
    %267 = vmatprep.subr.mxu0 0.0
    %268 = vmatpush1.msra.mxu0 %v241
    %269 = vmatprep.subr.mxu0 0.0
    %270 = vmatpush1.msra.mxu0 %v242
    %271 = vmatprep.subr.mxu0 0.0
    %272 = vmatpush1.msra.mxu0 %v243
    %273 = vmatprep.subr.mxu0 0.0
    %274 = vmatpush1.msra.mxu0 %v244
    %275 = vmatprep.subr.mxu0 0.0
    %276 = vmatpush1.msra.mxu0 %v245
    %277 = vmatprep.subr.mxu0 0.0
    %278 = vmatpush1.msra.mxu0 %v246
    %279 = vmatprep.subr.mxu0 0.0
    %280 = vmatpush1.msra.mxu0 0.0
    %281 = vmatprep.subr.mxu0 0.0
    %282 = vmatpush1.msra.mxu0 0.0
    %283 = vmatprep.subr.mxu0 0.0
    %284 = vmatpush1.msra.mxu0 0.0
    %285 = vmatprep.subr.mxu0 0.0
    %286 = vmatpush1.msra.mxu0 0.0
    %287 = vmatprep.subr.mxu0 0.0
    %288 = vmatpush1.msra.mxu0 0.0
    %289 = vmatprep.subr.mxu0 0.0
    %290 = vmatpush1.msra.mxu0 0.0
    %291 = vmatprep.subr.mxu0 0.0
    %292 = vmatpush1.msra.mxu0 0.0
    %293 = vmatprep.subr.mxu0 0.0
    %294 = vmatpush1.msra.mxu0 0.0
    %295 = vmatprep.subr.mxu0 0.0
    %296 = vmatpush1.msra.mxu0 0.0
    %297 = vmatprep.subr.mxu0 0.0
    %298 = vmatpush1.msra.mxu0 0.0
    %299 = vmatprep.subr.mxu0 0.0
    %300 = vmatpush1.msra.mxu0 0.0
    %301 = vmatprep.subr.mxu0 0.0
    %302 = vmatpush1.msra.mxu0 0.0
    %303 = vmatprep.subr.mxu0 0.0
    %304 = vmatpush1.msra.mxu0 0.0
    %305 = vmatprep.subr.mxu0 0.0
    %306 = vmatpush1.msra.mxu0 0.0
    %307 = vmatprep.subr.mxu0 0.0
    %308 = vmatpush1.msra.mxu0 0.0
    %309 = vmatprep.subr.mxu0 0.0
    %310 = vmatpush1.msra.mxu0 0.0
    %311 = vmatprep.mubr.f32.mxu0 0.0
    %312 = vmatmul.mubr.f32.gmra.mrb[0].mxu0 %v229
    %v313 = vpop.f32.mrb[0].mxu0
    %v314 = vadd.f32 0.0, %v313
    %v315 = vpop.f32.mrb[0].mxu0
    %316 = vdwg.mxu0
    %v317 = vmul.f32 %v223, %v87
    %v318 = vadd.f32 %v317, %v314
    %vm319 = vcmp.gt.f32.partialorder %v318, %v82
    %v320 = vsel %vm319, 1, 0
    %v321 = vcvt.s32.f32 %v320
    %v322 = vsel %vm319, 0.0, %v318
    %v323 = vld [vmem:[#allocation9] sm:$0xff]
    %v324 = vld [vmem:[#allocation9 + $0x8] sm:$0xff]
    %v325 = vld [vmem:[#allocation9 + $0x10] sm:$0xff]
    %v326 = vld [vmem:[#allocation9 + $0x18] sm:$0xff]
    %v327 = vld [vmem:[#allocation9 + $0x20] sm:$0xff]
    %v328 = vld [vmem:[#allocation9 + $0x28] sm:$0xff]
    %v329 = vld [vmem:[#allocation9 + $0x30] sm:$0xff]
    %v330 = vld [vmem:[#allocation9 + $0x38] sm:$0xff]
    %v331 = vld [vmem:[#allocation9 + $0x40] sm:$0xff]
    %v332 = vld [vmem:[#allocation9 + $0x48] sm:$0xff]
    %v333 = vld [vmem:[#allocation9 + $0x50] sm:$0xff]
    %v334 = vld [vmem:[#allocation9 + $0x58] sm:$0xff]
    %v335 = vld [vmem:[#allocation9 + $0x60] sm:$0xff]
    %v336 = vld [vmem:[#allocation9 + $0x68] sm:$0xff]
    %v337 = vld [vmem:[#allocation9 + $0x70] sm:$0xff]
    %v338 = vld [vmem:[#allocation9 + $0x78] sm:$0xff]
    %339 = vmatprep.subr.mxu0 0.0
    %340 = vmatpush1.msra.mxu0 %v323
    %341 = vmatprep.subr.mxu0 0.0
    %342 = vmatpush1.msra.mxu0 %v324
    %343 = vmatprep.subr.mxu0 0.0
    %344 = vmatpush1.msra.mxu0 %v325
    %345 = vmatprep.subr.mxu0 0.0
    %346 = vmatpush1.msra.mxu0 %v326
    %347 = vmatprep.subr.mxu0 0.0
    %348 = vmatpush1.msra.mxu0 %v327
    %349 = vmatprep.subr.mxu0 0.0
    %350 = vmatpush1.msra.mxu0 %v328
    %351 = vmatprep.subr.mxu0 0.0
    %352 = vmatpush1.msra.mxu0 %v329
    %353 = vmatprep.subr.mxu0 0.0
    %354 = vmatpush1.msra.mxu0 %v330
    %355 = vmatprep.subr.mxu0 0.0
    %356 = vmatpush1.msra.mxu0 %v331
    %357 = vmatprep.subr.mxu0 0.0
    %358 = vmatpush1.msra.mxu0 %v332
    %359 = vmatprep.subr.mxu0 0.0
    %360 = vmatpush1.msra.mxu0 %v333
    %361 = vmatprep.subr.mxu0 0.0
    %362 = vmatpush1.msra.mxu0 %v334
    %363 = vmatprep.subr.mxu0 0.0
    %364 = vmatpush1.msra.mxu0 %v335
    %365 = vmatprep.subr.mxu0 0.0
    %366 = vmatpush1.msra.mxu0 %v336
    %367 = vmatprep.subr.mxu0 0.0
    %368 = vmatpush1.msra.mxu0 %v337
    %369 = vmatprep.subr.mxu0 0.0
    %370 = vmatpush1.msra.mxu0 %v338
    %371 = vmatprep.subr.mxu0 0.0
    %372 = vmatpush1.msra.mxu0 0.0
    %373 = vmatprep.subr.mxu0 0.0
    %374 = vmatpush1.msra.mxu0 0.0
    %375 = vmatprep.subr.mxu0 0.0
    %376 = vmatpush1.msra.mxu0 0.0
    %377 = vmatprep.subr.mxu0 0.0
    %378 = vmatpush1.msra.mxu0 0.0
    %379 = vmatprep.subr.mxu0 0.0
    %380 = vmatpush1.msra.mxu0 0.0
    %381 = vmatprep.subr.mxu0 0.0
    %382 = vmatpush1.msra.mxu0 0.0
    %383 = vmatprep.subr.mxu0 0.0
    %384 = vmatpush1.msra.mxu0 0.0
    %385 = vmatprep.subr.mxu0 0.0
    %386 = vmatpush1.msra.mxu0 0.0
    %387 = vmatprep.subr.mxu0 0.0
    %388 = vmatpush1.msra.mxu0 0.0
    %389 = vmatprep.subr.mxu0 0.0
    %390 = vmatpush1.msra.mxu0 0.0
    %391 = vmatprep.subr.mxu0 0.0
    %392 = vmatpush1.msra.mxu0 0.0
    %393 = vmatprep.subr.mxu0 0.0
    %394 = vmatpush1.msra.mxu0 0.0
    %395 = vmatprep.subr.mxu0 0.0
    %396 = vmatpush1.msra.mxu0 0.0
    %397 = vmatprep.subr.mxu0 0.0
    %398 = vmatpush1.msra.mxu0 0.0
    %399 = vmatprep.subr.mxu0 0.0
    %400 = vmatpush1.msra.mxu0 0.0
    %401 = vmatprep.subr.mxu0 0.0
    %402 = vmatpush1.msra.mxu0 0.0
    %403 = vmatprep.mubr.f32.mxu0 0.0
    %404 = vmatmul.mubr.f32.gmra.mrb[0].mxu0 %v321
    %v405 = vpop.f32.mrb[0].mxu0
    %v406 = vadd.f32 0.0, %v405
    %v407 = vpop.f32.mrb[0].mxu0
    %408 = vdwg.mxu0
    %v409 = vmul.f32 %v224, %v92
    %v410 = vadd.f32 %v409, %v406
    %411 = vst [vmem:[%s5] sm:$0xff] %v410
    %v412 = vmul.f32 %v230, %v77
    %v413 = vadd.f32 %v412, %v189
    %vm414 = vcmp.gt.f32.partialorder %v413, %v72
    %v415 = vsel %vm414, 1, 0
    %v416 = vcvt.s32.f32 %v415
    %v417 = vsel %vm414, 0.0, %v413
    %v418 = vld [vmem:[#allocation7] sm:$0xff]
    %v419 = vld [vmem:[#allocation7 + $0x8] sm:$0xff]
    %v420 = vld [vmem:[#allocation7 + $0x10] sm:$0xff]
    %v421 = vld [vmem:[#allocation7 + $0x18] sm:$0xff]
    %v422 = vld [vmem:[#allocation7 + $0x20] sm:$0xff]
    %v423 = vld [vmem:[#allocation7 + $0x28] sm:$0xff]
    %v424 = vld [vmem:[#allocation7 + $0x30] sm:$0xff]
    %v425 = vld [vmem:[#allocation7 + $0x38] sm:$0xff]
    %v426 = vld [vmem:[#allocation7 + $0x40] sm:$0xff]
    %v427 = vld [vmem:[#allocation7 + $0x48] sm:$0xff]
    %v428 = vld [vmem:[#allocation7 + $0x50] sm:$0xff]
    %v429 = vld [vmem:[#allocation7 + $0x58] sm:$0xff]
    %v430 = vld [vmem:[#allocation7 + $0x60] sm:$0xff]
    %v431 = vld [vmem:[#allocation7 + $0x68] sm:$0xff]
    %v432 = vld [vmem:[#allocation7 + $0x70] sm:$0xff]
    %v433 = vld [vmem:[#allocation7 + $0x78] sm:$0xff]
    %434 = vmatprep.subr.mxu0 0.0
    %435 = vmatpush1.msra.mxu0 %v418
    %436 = vmatprep.subr.mxu0 0.0
    %437 = vmatpush1.msra.mxu0 %v419
    %438 = vmatprep.subr.mxu0 0.0
    %439 = vmatpush1.msra.mxu0 %v420
    %440 = vmatprep.subr.mxu0 0.0
    %441 = vmatpush1.msra.mxu0 %v421
    %442 = vmatprep.subr.mxu0 0.0
    %443 = vmatpush1.msra.mxu0 %v422
    %444 = vmatprep.subr.mxu0 0.0
    %445 = vmatpush1.msra.mxu0 %v423
    %446 = vmatprep.subr.mxu0 0.0
    %447 = vmatpush1.msra.mxu0 %v424
    %448 = vmatprep.subr.mxu0 0.0
    %449 = vmatpush1.msra.mxu0 %v425
    %450 = vmatprep.subr.mxu0 0.0
    %451 = vmatpush1.msra.mxu0 %v426
    %452 = vmatprep.subr.mxu0 0.0
    %453 = vmatpush1.msra.mxu0 %v427
    %454 = vmatprep.subr.mxu0 0.0
    %455 = vmatpush1.msra.mxu0 %v428
    %456 = vmatprep.subr.mxu0 0.0
    %457 = vmatpush1.msra.mxu0 %v429
    %458 = vmatprep.subr.mxu0 0.0
    %459 = vmatpush1.msra.mxu0 %v430
    %460 = vmatprep.subr.mxu0 0.0
    %461 = vmatpush1.msra.mxu0 %v431
    %462 = vmatprep.subr.mxu0 0.0
    %463 = vmatpush1.msra.mxu0 %v432
    %464 = vmatprep.subr.mxu0 0.0
    %465 = vmatpush1.msra.mxu0 %v433
    %466 = vmatprep.subr.mxu0 0.0
    %467 = vmatpush1.msra.mxu0 0.0
    %468 = vmatprep.subr.mxu0 0.0
    %469 = vmatpush1.msra.mxu0 0.0
    %470 = vmatprep.subr.mxu0 0.0
    %471 = vmatpush1.msra.mxu0 0.0
    %472 = vmatprep.subr.mxu0 0.0
    %473 = vmatpush1.msra.mxu0 0.0
    %474 = vmatprep.subr.mxu0 0.0
    %475 = vmatpush1.msra.mxu0 0.0
    %476 = vmatprep.subr.mxu0 0.0
    %477 = vmatpush1.msra.mxu0 0.0
    %478 = vmatprep.subr.mxu0 0.0
    %479 = vmatpush1.msra.mxu0 0.0
    %480 = vmatprep.subr.mxu0 0.0
    %481 = vmatpush1.msra.mxu0 0.0
    %482 = vmatprep.subr.mxu0 0.0
    %483 = vmatpush1.msra.mxu0 0.0
    %484 = vmatprep.subr.mxu0 0.0
    %485 = vmatpush1.msra.mxu0 0.0
    %486 = vmatprep.subr.mxu0 0.0
    %487 = vmatpush1.msra.mxu0 0.0
    %488 = vmatprep.subr.mxu0 0.0
    %489 = vmatpush1.msra.mxu0 0.0
    %490 = vmatprep.subr.mxu0 0.0
    %491 = vmatpush1.msra.mxu0 0.0
    %492 = vmatprep.subr.mxu0 0.0
    %493 = vmatpush1.msra.mxu0 0.0
    %494 = vmatprep.subr.mxu0 0.0
    %495 = vmatpush1.msra.mxu0 0.0
    %496 = vmatprep.subr.mxu0 0.0
    %497 = vmatpush1.msra.mxu0 0.0
    %498 = vmatprep.mubr.f32.mxu0 0.0
    %499 = vmatmul.mubr.f32.gmra.mrb[0].mxu0 %v416
    %v500 = vpop.f32.mrb[0].mxu0
    %v501 = vadd.f32 0.0, %v500
    %v502 = vpop.f32.mrb[0].mxu0
    %503 = vdwg.mxu0
    %v504 = vmul.f32 %v322, %v87
    %v505 = vadd.f32 %v504, %v501
    %vm506 = vcmp.gt.f32.partialorder %v505, %v82
    %v507 = vsel %vm506, 1, 0
    %v508 = vcvt.s32.f32 %v507
    %v509 = vsel %vm506, 0.0, %v505
    %v510 = vld [vmem:[#allocation9] sm:$0xff]
    %v511 = vld [vmem:[#allocation9 + $0x8] sm:$0xff]
    %v512 = vld [vmem:[#allocation9 + $0x10] sm:$0xff]
    %v513 = vld [vmem:[#allocation9 + $0x18] sm:$0xff]
    %v514 = vld [vmem:[#allocation9 + $0x20] sm:$0xff]
    %v515 = vld [vmem:[#allocation9 + $0x28] sm:$0xff]
    %v516 = vld [vmem:[#allocation9 + $0x30] sm:$0xff]
    %v517 = vld [vmem:[#allocation9 + $0x38] sm:$0xff]
    %v518 = vld [vmem:[#allocation9 + $0x40] sm:$0xff]
    %v519 = vld [vmem:[#allocation9 + $0x48] sm:$0xff]
    %v520 = vld [vmem:[#allocation9 + $0x50] sm:$0xff]
    %v521 = vld [vmem:[#allocation9 + $0x58] sm:$0xff]
    %v522 = vld [vmem:[#allocation9 + $0x60] sm:$0xff]
    %v523 = vld [vmem:[#allocation9 + $0x68] sm:$0xff]
    %v524 = vld [vmem:[#allocation9 + $0x70] sm:$0xff]
    %v525 = vld [vmem:[#allocation9 + $0x78] sm:$0xff]
    %526 = vmatprep.subr.mxu0 0.0
    %527 = vmatpush1.msra.mxu0 %v510
    %528 = vmatprep.subr.mxu0 0.0
    %529 = vmatpush1.msra.mxu0 %v511
    %530 = vmatprep.subr.mxu0 0.0
    %531 = vmatpush1.msra.mxu0 %v512
    %532 = vmatprep.subr.mxu0 0.0
    %533 = vmatpush1.msra.mxu0 %v513
    %534 = vmatprep.subr.mxu0 0.0
    %535 = vmatpush1.msra.mxu0 %v514
    %536 = vmatprep.subr.mxu0 0.0
    %537 = vmatpush1.msra.mxu0 %v515
    %538 = vmatprep.subr.mxu0 0.0
    %539 = vmatpush1.msra.mxu0 %v516
    %540 = vmatprep.subr.mxu0 0.0
    %541 = vmatpush1.msra.mxu0 %v517
    %542 = vmatprep.subr.mxu0 0.0
    %543 = vmatpush1.msra.mxu0 %v518
    %544 = vmatprep.subr.mxu0 0.0
    %545 = vmatpush1.msra.mxu0 %v519
    %546 = vmatprep.subr.mxu0 0.0
    %547 = vmatpush1.msra.mxu0 %v520
    %548 = vmatprep.subr.mxu0 0.0
    %549 = vmatpush1.msra.mxu0 %v521
    %550 = vmatprep.subr.mxu0 0.0
    %551 = vmatpush1.msra.mxu0 %v522
    %552 = vmatprep.subr.mxu0 0.0
    %553 = vmatpush1.msra.mxu0 %v523
    %554 = vmatprep.subr.mxu0 0.0
    %555 = vmatpush1.msra.mxu0 %v524
    %556 = vmatprep.subr.mxu0 0.0
    %557 = vmatpush1.msra.mxu0 %v525
    %558 = vmatprep.subr.mxu0 0.0
    %559 = vmatpush1.msra.mxu0 0.0
    %560 = vmatprep.subr.mxu0 0.0
    %561 = vmatpush1.msra.mxu0 0.0
    %562 = vmatprep.subr.mxu0 0.0
    %563 = vmatpush1.msra.mxu0 0.0
    %564 = vmatprep.subr.mxu0 0.0
    %565 = vmatpush1.msra.mxu0 0.0
    %566 = vmatprep.subr.mxu0 0.0
    %567 = vmatpush1.msra.mxu0 0.0
    %568 = vmatprep.subr.mxu0 0.0
    %569 = vmatpush1.msra.mxu0 0.0
    %570 = vmatprep.subr.mxu0 0.0
    %571 = vmatpush1.msra.mxu0 0.0
    %572 = vmatprep.subr.mxu0 0.0
    %573 = vmatpush1.msra.mxu0 0.0
    %574 = vmatprep.subr.mxu0 0.0
    %575 = vmatpush1.msra.mxu0 0.0
    %576 = vmatprep.subr.mxu0 0.0
    %577 = vmatpush1.msra.mxu0 0.0
    %578 = vmatprep.subr.mxu0 0.0
    %579 = vmatpush1.msra.mxu0 0.0
    %580 = vmatprep.subr.mxu0 0.0
    %581 = vmatpush1.msra.mxu0 0.0
    %582 = vmatprep.subr.mxu0 0.0
    %583 = vmatpush1.msra.mxu0 0.0
    %584 = vmatprep.subr.mxu0 0.0
    %585 = vmatpush1.msra.mxu0 0.0
    %586 = vmatprep.subr.mxu0 0.0
    %587 = vmatpush1.msra.mxu0 0.0
    %588 = vmatprep.subr.mxu0 0.0
    %589 = vmatpush1.msra.mxu0 0.0
    %590 = vmatprep.mubr.f32.mxu0 0.0
    %591 = vmatmul.mubr.f32.gmra.mrb[0].mxu0 %v508
    %v592 = vpop.f32.mrb[0].mxu0
    %v593 = vadd.f32 0.0, %v592
    %v594 = vpop.f32.mrb[0].mxu0
    %595 = vdwg.mxu0
    %v596 = vmul.f32 %v410, %v92
    %v597 = vadd.f32 %v596, %v593
    %s598 = scalar_lea.vmem %s5, 8
    %599 = vst [vmem:[%s598] sm:$0xff] %v597
    %v600 = vmul.f32 %v417, %v77
    %v601 = vadd.f32 %v600, %v194
    %vm602 = vcmp.gt.f32.partialorder %v601, %v72
    %v603 = vsel %vm602, 1, 0
    %v604 = vcvt.s32.f32 %v603
    %v605 = vsel %vm602, 0.0, %v601
    %v606 = vld [vmem:[#allocation7] sm:$0xff]
    %v607 = vld [vmem:[#allocation7 + $0x8] sm:$0xff]
    %v608 = vld [vmem:[#allocation7 + $0x10] sm:$0xff]
    %v609 = vld [vmem:[#allocation7 + $0x18] sm:$0xff]
    %v610 = vld [vmem:[#allocation7 + $0x20] sm:$0xff]
    %v611 = vld [vmem:[#allocation7 + $0x28] sm:$0xff]
    %v612 = vld [vmem:[#allocation7 + $0x30] sm:$0xff]
    %v613 = vld [vmem:[#allocation7 + $0x38] sm:$0xff]
    %v614 = vld [vmem:[#allocation7 + $0x40] sm:$0xff]
    %v615 = vld [vmem:[#allocation7 + $0x48] sm:$0xff]
    %v616 = vld [vmem:[#allocation7 + $0x50] sm:$0xff]
    %v617 = vld [vmem:[#allocation7 + $0x58] sm:$0xff]
    %v618 = vld [vmem:[#allocation7 + $0x60] sm:$0xff]
    %v619 = vld [vmem:[#allocation7 + $0x68] sm:$0xff]
    %v620 = vld [vmem:[#allocation7 + $0x70] sm:$0xff]
    %v621 = vld [vmem:[#allocation7 + $0x78] sm:$0xff]
    %622 = vmatprep.subr.mxu0 0.0
    %623 = vmatpush1.msra.mxu0 %v606
    %624 = vmatprep.subr.mxu0 0.0
    %625 = vmatpush1.msra.mxu0 %v607
    %626 = vmatprep.subr.mxu0 0.0
    %627 = vmatpush1.msra.mxu0 %v608
    %628 = vmatprep.subr.mxu0 0.0
    %629 = vmatpush1.msra.mxu0 %v609
    %630 = vmatprep.subr.mxu0 0.0
    %631 = vmatpush1.msra.mxu0 %v610
    %632 = vmatprep.subr.mxu0 0.0
    %633 = vmatpush1.msra.mxu0 %v611
    %634 = vmatprep.subr.mxu0 0.0
    %635 = vmatpush1.msra.mxu0 %v612
    %636 = vmatprep.subr.mxu0 0.0
    %637 = vmatpush1.msra.mxu0 %v613
    %638 = vmatprep.subr.mxu0 0.0
    %639 = vmatpush1.msra.mxu0 %v614
    %640 = vmatprep.subr.mxu0 0.0
    %641 = vmatpush1.msra.mxu0 %v615
    %642 = vmatprep.subr.mxu0 0.0
    %643 = vmatpush1.msra.mxu0 %v616
    %644 = vmatprep.subr.mxu0 0.0
    %645 = vmatpush1.msra.mxu0 %v617
    %646 = vmatprep.subr.mxu0 0.0
    %647 = vmatpush1.msra.mxu0 %v618
    %648 = vmatprep.subr.mxu0 0.0
    %649 = vmatpush1.msra.mxu0 %v619
    %650 = vmatprep.subr.mxu0 0.0
    %651 = vmatpush1.msra.mxu0 %v620
    %652 = vmatprep.subr.mxu0 0.0
    %653 = vmatpush1.msra.mxu0 %v621
    %654 = vmatprep.subr.mxu0 0.0
    %655 = vmatpush1.msra.mxu0 0.0
    %656 = vmatprep.subr.mxu0 0.0
    %657 = vmatpush1.msra.mxu0 0.0
    %658 = vmatprep.subr.mxu0 0.0
    %659 = vmatpush1.msra.mxu0 0.0
    %660 = vmatprep.subr.mxu0 0.0
    %661 = vmatpush1.msra.mxu0 0.0
    %662 = vmatprep.subr.mxu0 0.0
    %663 = vmatpush1.msra.mxu0 0.0
    %664 = vmatprep.subr.mxu0 0.0
    %665 = vmatpush1.msra.mxu0 0.0
    %666 = vmatprep.subr.mxu0 0.0
    %667 = vmatpush1.msra.mxu0 0.0
    %668 = vmatprep.subr.mxu0 0.0
    %669 = vmatpush1.msra.mxu0 0.0
    %670 = vmatprep.subr.mxu0 0.0
    %671 = vmatpush1.msra.mxu0 0.0
    %672 = vmatprep.subr.mxu0 0.0
    %673 = vmatpush1.msra.mxu0 0.0
    %674 = vmatprep.subr.mxu0 0.0
    %675 = vmatpush1.msra.mxu0 0.0
    %676 = vmatprep.subr.mxu0 0.0
    %677 = vmatpush1.msra.mxu0 0.0
    %678 = vmatprep.subr.mxu0 0.0
    %679 = vmatpush1.msra.mxu0 0.0
    %680 = vmatprep.subr.mxu0 0.0
    %681 = vmatpush1.msra.mxu0 0.0
    %682 = vmatprep.subr.mxu0 0.0
    %683 = vmatpush1.msra.mxu0 0.0
    %684 = vmatprep.subr.mxu0 0.0
    %685 = vmatpush1.msra.mxu0 0.0
    %686 = vmatprep.mubr.f32.mxu0 0.0
    %687 = vmatmul.mubr.f32.gmra.mrb[0].mxu0 %v604
    %v688 = vpop.f32.mrb[0].mxu0
    %v689 = vadd.f32 0.0, %v688
    %v690 = vpop.f32.mrb[0].mxu0
    %691 = vdwg.mxu0
    %v692 = vmul.f32 %v509, %v87
    %v693 = vadd.f32 %v692, %v689
    %vm694 = vcmp.gt.f32.partialorder %v693, %v82
    %v695 = vsel %vm694, 1, 0
    %v696 = vcvt.s32.f32 %v695
    %v697 = vsel %vm694, 0.0, %v693
    %v698 = vld [vmem:[#allocation9] sm:$0xff]
    %v699 = vld [vmem:[#allocation9 + $0x8] sm:$0xff]
    %v700 = vld [vmem:[#allocation9 + $0x10] sm:$0xff]
    %v701 = vld [vmem:[#allocation9 + $0x18] sm:$0xff]
    %v702 = vld [vmem:[#allocation9 + $0x20] sm:$0xff]
    %v703 = vld [vmem:[#allocation9 + $0x28] sm:$0xff]
    %v704 = vld [vmem:[#allocation9 + $0x30] sm:$0xff]
    %v705 = vld [vmem:[#allocation9 + $0x38] sm:$0xff]
    %v706 = vld [vmem:[#allocation9 + $0x40] sm:$0xff]
    %v707 = vld [vmem:[#allocation9 + $0x48] sm:$0xff]
    %v708 = vld [vmem:[#allocation9 + $0x50] sm:$0xff]
    %v709 = vld [vmem:[#allocation9 + $0x58] sm:$0xff]
    %v710 = vld [vmem:[#allocation9 + $0x60] sm:$0xff]
    %v711 = vld [vmem:[#allocation9 + $0x68] sm:$0xff]
    %v712 = vld [vmem:[#allocation9 + $0x70] sm:$0xff]
    %v713 = vld [vmem:[#allocation9 + $0x78] sm:$0xff]
    %714 = vmatprep.subr.mxu0 0.0
    %715 = vmatpush1.msra.mxu0 %v698
    %716 = vmatprep.subr.mxu0 0.0
    %717 = vmatpush1.msra.mxu0 %v699
    %718 = vmatprep.subr.mxu0 0.0
    %719 = vmatpush1.msra.mxu0 %v700
    %720 = vmatprep.subr.mxu0 0.0
    %721 = vmatpush1.msra.mxu0 %v701
    %722 = vmatprep.subr.mxu0 0.0
    %723 = vmatpush1.msra.mxu0 %v702
    %724 = vmatprep.subr.mxu0 0.0
    %725 = vmatpush1.msra.mxu0 %v703
    %726 = vmatprep.subr.mxu0 0.0
    %727 = vmatpush1.msra.mxu0 %v704
    %728 = vmatprep.subr.mxu0 0.0
    %729 = vmatpush1.msra.mxu0 %v705
    %730 = vmatprep.subr.mxu0 0.0
    %731 = vmatpush1.msra.mxu0 %v706
    %732 = vmatprep.subr.mxu0 0.0
    %733 = vmatpush1.msra.mxu0 %v707
    %734 = vmatprep.subr.mxu0 0.0
    %735 = vmatpush1.msra.mxu0 %v708
    %736 = vmatprep.subr.mxu0 0.0
    %737 = vmatpush1.msra.mxu0 %v709
    %738 = vmatprep.subr.mxu0 0.0
    %739 = vmatpush1.msra.mxu0 %v710
    %740 = vmatprep.subr.mxu0 0.0
    %741 = vmatpush1.msra.mxu0 %v711
    %742 = vmatprep.subr.mxu0 0.0
    %743 = vmatpush1.msra.mxu0 %v712
    %744 = vmatprep.subr.mxu0 0.0
    %745 = vmatpush1.msra.mxu0 %v713
    %746 = vmatprep.subr.mxu0 0.0
    %747 = vmatpush1.msra.mxu0 0.0
    %748 = vmatprep.subr.mxu0 0.0
    %749 = vmatpush1.msra.mxu0 0.0
    %750 = vmatprep.subr.mxu0 0.0
    %751 = vmatpush1.msra.mxu0 0.0
    %752 = vmatprep.subr.mxu0 0.0
    %753 = vmatpush1.msra.mxu0 0.0
    %754 = vmatprep.subr.mxu0 0.0
    %755 = vmatpush1.msra.mxu0 0.0
    %756 = vmatprep.subr.mxu0 0.0
    %757 = vmatpush1.msra.mxu0 0.0
    %758 = vmatprep.subr.mxu0 0.0
    %759 = vmatpush1.msra.mxu0 0.0
    %760 = vmatprep.subr.mxu0 0.0
    %761 = vmatpush1.msra.mxu0 0.0
    %762 = vmatprep.subr.mxu0 0.0
    %763 = vmatpush1.msra.mxu0 0.0
    %764 = vmatprep.subr.mxu0 0.0
    %765 = vmatpush1.msra.mxu0 0.0
    %766 = vmatprep.subr.mxu0 0.0
    %767 = vmatpush1.msra.mxu0 0.0
    %768 = vmatprep.subr.mxu0 0.0
    %769 = vmatpush1.msra.mxu0 0.0
    %770 = vmatprep.subr.mxu0 0.0
    %771 = vmatpush1.msra.mxu0 0.0
    %772 = vmatprep.subr.mxu0 0.0
    %773 = vmatpush1.msra.mxu0 0.0
    %774 = vmatprep.subr.mxu0 0.0
    %775 = vmatpush1.msra.mxu0 0.0
    %776 = vmatprep.subr.mxu0 0.0
    %777 = vmatpush1.msra.mxu0 0.0
    %778 = vmatprep.mubr.f32.mxu0 0.0
    %779 = vmatmul.mubr.f32.gmra.mrb[0].mxu0 %v696
    %v780 = vpop.f32.mrb[0].mxu0
    %v781 = vadd.f32 0.0, %v780
    %v782 = vpop.f32.mrb[0].mxu0
    %783 = vdwg.mxu0
    %v784 = vmul.f32 %v597, %v92
    %v785 = vadd.f32 %v784, %v781
    %s786 = scalar_lea.vmem %s5, 16
    %787 = vst [vmem:[%s786] sm:$0xff] %v785
    %v788 = vmul.f32 %v605, %v77
    %v789 = vadd.f32 %v788, %v199
    %vm790 = vcmp.gt.f32.partialorder %v789, %v72
    %v791 = vsel %vm790, 1, 0
    %v792 = vcvt.s32.f32 %v791
    %v793 = vsel %vm790, 0.0, %v789
    %v794 = vld [vmem:[#allocation7] sm:$0xff]
    %v795 = vld [vmem:[#allocation7 + $0x8] sm:$0xff]
    %v796 = vld [vmem:[#allocation7 + $0x10] sm:$0xff]
    %v797 = vld [vmem:[#allocation7 + $0x18] sm:$0xff]
    %v798 = vld [vmem:[#allocation7 + $0x20] sm:$0xff]
    %v799 = vld [vmem:[#allocation7 + $0x28] sm:$0xff]
    %v800 = vld [vmem:[#allocation7 + $0x30] sm:$0xff]
    %v801 = vld [vmem:[#allocation7 + $0x38] sm:$0xff]
    %v802 = vld [vmem:[#allocation7 + $0x40] sm:$0xff]
    %v803 = vld [vmem:[#allocation7 + $0x48] sm:$0xff]
    %v804 = vld [vmem:[#allocation7 + $0x50] sm:$0xff]
    %v805 = vld [vmem:[#allocation7 + $0x58] sm:$0xff]
    %v806 = vld [vmem:[#allocation7 + $0x60] sm:$0xff]
    %v807 = vld [vmem:[#allocation7 + $0x68] sm:$0xff]
    %v808 = vld [vmem:[#allocation7 + $0x70] sm:$0xff]
    %v809 = vld [vmem:[#allocation7 + $0x78] sm:$0xff]
    %810 = vmatprep.subr.mxu0 0.0
    %811 = vmatpush1.msra.mxu0 %v794
    %812 = vmatprep.subr.mxu0 0.0
    %813 = vmatpush1.msra.mxu0 %v795
    %814 = vmatprep.subr.mxu0 0.0
    %815 = vmatpush1.msra.mxu0 %v796
    %816 = vmatprep.subr.mxu0 0.0
    %817 = vmatpush1.msra.mxu0 %v797
    %818 = vmatprep.subr.mxu0 0.0
    %819 = vmatpush1.msra.mxu0 %v798
    %820 = vmatprep.subr.mxu0 0.0
    %821 = vmatpush1.msra.mxu0 %v799
    %822 = vmatprep.subr.mxu0 0.0
    %823 = vmatpush1.msra.mxu0 %v800
    %824 = vmatprep.subr.mxu0 0.0
    %825 = vmatpush1.msra.mxu0 %v801
    %826 = vmatprep.subr.mxu0 0.0
    %827 = vmatpush1.msra.mxu0 %v802
    %828 = vmatprep.subr.mxu0 0.0
    %829 = vmatpush1.msra.mxu0 %v803
    %830 = vmatprep.subr.mxu0 0.0
    %831 = vmatpush1.msra.mxu0 %v804
    %832 = vmatprep.subr.mxu0 0.0
    %833 = vmatpush1.msra.mxu0 %v805
    %834 = vmatprep.subr.mxu0 0.0
    %835 = vmatpush1.msra.mxu0 %v806
    %836 = vmatprep.subr.mxu0 0.0
    %837 = vmatpush1.msra.mxu0 %v807
    %838 = vmatprep.subr.mxu0 0.0
    %839 = vmatpush1.msra.mxu0 %v808
    %840 = vmatprep.subr.mxu0 0.0
    %841 = vmatpush1.msra.mxu0 %v809
    %842 = vmatprep.subr.mxu0 0.0
    %843 = vmatpush1.msra.mxu0 0.0
    %844 = vmatprep.subr.mxu0 0.0
    %845 = vmatpush1.msra.mxu0 0.0
    %846 = vmatprep.subr.mxu0 0.0
    %847 = vmatpush1.msra.mxu0 0.0
    %848 = vmatprep.subr.mxu0 0.0
    %849 = vmatpush1.msra.mxu0 0.0
    %850 = vmatprep.subr.mxu0 0.0
    %851 = vmatpush1.msra.mxu0 0.0
    %852 = vmatprep.subr.mxu0 0.0
    %853 = vmatpush1.msra.mxu0 0.0
    %854 = vmatprep.subr.mxu0 0.0
    %855 = vmatpush1.msra.mxu0 0.0
    %856 = vmatprep.subr.mxu0 0.0
    %857 = vmatpush1.msra.mxu0 0.0
    %858 = vmatprep.subr.mxu0 0.0
    %859 = vmatpush1.msra.mxu0 0.0
    %860 = vmatprep.subr.mxu0 0.0
    %861 = vmatpush1.msra.mxu0 0.0
    %862 = vmatprep.subr.mxu0 0.0
    %863 = vmatpush1.msra.mxu0 0.0
    %864 = vmatprep.subr.mxu0 0.0
    %865 = vmatpush1.msra.mxu0 0.0
    %866 = vmatprep.subr.mxu0 0.0
    %867 = vmatpush1.msra.mxu0 0.0
    %868 = vmatprep.subr.mxu0 0.0
    %869 = vmatpush1.msra.mxu0 0.0
    %870 = vmatprep.subr.mxu0 0.0
    %871 = vmatpush1.msra.mxu0 0.0
    %872 = vmatprep.subr.mxu0 0.0
    %873 = vmatpush1.msra.mxu0 0.0
    %874 = vmatprep.mubr.f32.mxu0 0.0
    %875 = vmatmul.mubr.f32.gmra.mrb[0].mxu0 %v792
    %v876 = vpop.f32.mrb[0].mxu0
    %v877 = vadd.f32 0.0, %v876
    %v878 = vpop.f32.mrb[0].mxu0
    %879 = vdwg.mxu0
    %v880 = vmul.f32 %v697, %v87
    %v881 = vadd.f32 %v880, %v877
    %vm882 = vcmp.gt.f32.partialorder %v881, %v82
    %v883 = vsel %vm882, 1, 0
    %v884 = vcvt.s32.f32 %v883
    %v885 = vsel %vm882, 0.0, %v881
    %v886 = vld [vmem:[#allocation9] sm:$0xff]
    %v887 = vld [vmem:[#allocation9 + $0x8] sm:$0xff]
    %v888 = vld [vmem:[#allocation9 + $0x10] sm:$0xff]
    %v889 = vld [vmem:[#allocation9 + $0x18] sm:$0xff]
    %v890 = vld [vmem:[#allocation9 + $0x20] sm:$0xff]
    %v891 = vld [vmem:[#allocation9 + $0x28] sm:$0xff]
    %v892 = vld [vmem:[#allocation9 + $0x30] sm:$0xff]
    %v893 = vld [vmem:[#allocation9 + $0x38] sm:$0xff]
    %v894 = vld [vmem:[#allocation9 + $0x40] sm:$0xff]
    %v895 = vld [vmem:[#allocation9 + $0x48] sm:$0xff]
    %v896 = vld [vmem:[#allocation9 + $0x50] sm:$0xff]
    %v897 = vld [vmem:[#allocation9 + $0x58] sm:$0xff]
    %v898 = vld [vmem:[#allocation9 + $0x60] sm:$0xff]
    %v899 = vld [vmem:[#allocation9 + $0x68] sm:$0xff]
    %v900 = vld [vmem:[#allocation9 + $0x70] sm:$0xff]
    %v901 = vld [vmem:[#allocation9 + $0x78] sm:$0xff]
    %902 = vmatprep.subr.mxu0 0.0
    %903 = vmatpush1.msra.mxu0 %v886
    %904 = vmatprep.subr.mxu0 0.0
    %905 = vmatpush1.msra.mxu0 %v887
    %906 = vmatprep.subr.mxu0 0.0
    %907 = vmatpush1.msra.mxu0 %v888
    %908 = vmatprep.subr.mxu0 0.0
    %909 = vmatpush1.msra.mxu0 %v889
    %910 = vmatprep.subr.mxu0 0.0
    %911 = vmatpush1.msra.mxu0 %v890
    %912 = vmatprep.subr.mxu0 0.0
    %913 = vmatpush1.msra.mxu0 %v891
    %914 = vmatprep.subr.mxu0 0.0
    %915 = vmatpush1.msra.mxu0 %v892
    %916 = vmatprep.subr.mxu0 0.0
    %917 = vmatpush1.msra.mxu0 %v893
    %918 = vmatprep.subr.mxu0 0.0
    %919 = vmatpush1.msra.mxu0 %v894
    %920 = vmatprep.subr.mxu0 0.0
    %921 = vmatpush1.msra.mxu0 %v895
    %922 = vmatprep.subr.mxu0 0.0
    %923 = vmatpush1.msra.mxu0 %v896
    %924 = vmatprep.subr.mxu0 0.0
    %925 = vmatpush1.msra.mxu0 %v897
    %926 = vmatprep.subr.mxu0 0.0
    %927 = vmatpush1.msra.mxu0 %v898
    %928 = vmatprep.subr.mxu0 0.0
    %929 = vmatpush1.msra.mxu0 %v899
    %930 = vmatprep.subr.mxu0 0.0
    %931 = vmatpush1.msra.mxu0 %v900
    %932 = vmatprep.subr.mxu0 0.0
    %933 = vmatpush1.msra.mxu0 %v901
    %934 = vmatprep.subr.mxu0 0.0
    %935 = vmatpush1.msra.mxu0 0.0
    %936 = vmatprep.subr.mxu0 0.0
    %937 = vmatpush1.msra.mxu0 0.0
    %938 = vmatprep.subr.mxu0 0.0
    %939 = vmatpush1.msra.mxu0 0.0
    %940 = vmatprep.subr.mxu0 0.0
    %941 = vmatpush1.msra.mxu0 0.0
    %942 = vmatprep.subr.mxu0 0.0
    %943 = vmatpush1.msra.mxu0 0.0
    %944 = vmatprep.subr.mxu0 0.0
    %945 = vmatpush1.msra.mxu0 0.0
    %946 = vmatprep.subr.mxu0 0.0
    %947 = vmatpush1.msra.mxu0 0.0
    %948 = vmatprep.subr.mxu0 0.0
    %949 = vmatpush1.msra.mxu0 0.0
    %950 = vmatprep.subr.mxu0 0.0
    %951 = vmatpush1.msra.mxu0 0.0
    %952 = vmatprep.subr.mxu0 0.0
    %953 = vmatpush1.msra.mxu0 0.0
    %954 = vmatprep.subr.mxu0 0.0
    %955 = vmatpush1.msra.mxu0 0.0
    %956 = vmatprep.subr.mxu0 0.0
    %957 = vmatpush1.msra.mxu0 0.0
    %958 = vmatprep.subr.mxu0 0.0
    %959 = vmatpush1.msra.mxu0 0.0
    %960 = vmatprep.subr.mxu0 0.0
    %961 = vmatpush1.msra.mxu0 0.0
    %962 = vmatprep.subr.mxu0 0.0
    %963 = vmatpush1.msra.mxu0 0.0
    %964 = vmatprep.subr.mxu0 0.0
    %965 = vmatpush1.msra.mxu0 0.0
    %966 = vmatprep.mubr.f32.mxu0 0.0
    %967 = vmatmul.mubr.f32.gmra.mrb[0].mxu0 %v884
    %v968 = vpop.f32.mrb[0].mxu0
    %v969 = vadd.f32 0.0, %v968
    %v970 = vpop.f32.mrb[0].mxu0
    %971 = vdwg.mxu0
    %v972 = vmul.f32 %v785, %v92
    %v973 = vadd.f32 %v972, %v969
    %s974 = scalar_lea.vmem %s5, 24
    %975 = vst [vmem:[%s974] sm:$0xff] %v973
    %v976 = vmul.f32 %v793, %v77
    %v977 = vadd.f32 %v976, %v204
    %vm978 = vcmp.gt.f32.partialorder %v977, %v72
    %v979 = vsel %vm978, 1, 0
    %v980 = vcvt.s32.f32 %v979
    %v981 = vsel %vm978, 0.0, %v977
    %v982 = vld [vmem:[#allocation7] sm:$0xff]
    %v983 = vld [vmem:[#allocation7 + $0x8] sm:$0xff]
    %v984 = vld [vmem:[#allocation7 + $0x10] sm:$0xff]
    %v985 = vld [vmem:[#allocation7 + $0x18] sm:$0xff]
    %v986 = vld [vmem:[#allocation7 + $0x20] sm:$0xff]
    %v987 = vld [vmem:[#allocation7 + $0x28] sm:$0xff]
    %v988 = vld [vmem:[#allocation7 + $0x30] sm:$0xff]
    %v989 = vld [vmem:[#allocation7 + $0x38] sm:$0xff]
    %v990 = vld [vmem:[#allocation7 + $0x40] sm:$0xff]
    %v991 = vld [vmem:[#allocation7 + $0x48] sm:$0xff]
    %v992 = vld [vmem:[#allocation7 + $0x50] sm:$0xff]
    %v993 = vld [vmem:[#allocation7 + $0x58] sm:$0xff]
    %v994 = vld [vmem:[#allocation7 + $0x60] sm:$0xff]
    %v995 = vld [vmem:[#allocation7 + $0x68] sm:$0xff]
    %v996 = vld [vmem:[#allocation7 + $0x70] sm:$0xff]
    %v997 = vld [vmem:[#allocation7 + $0x78] sm:$0xff]
    %998 = vmatprep.subr.mxu0 0.0
    %999 = vmatpush1.msra.mxu0 %v982
    %1000 = vmatprep.subr.mxu0 0.0
    %1001 = vmatpush1.msra.mxu0 %v983
    %1002 = vmatprep.subr.mxu0 0.0
    %1003 = vmatpush1.msra.mxu0 %v984
    %1004 = vmatprep.subr.mxu0 0.0
    %1005 = vmatpush1.msra.mxu0 %v985
    %1006 = vmatprep.subr.mxu0 0.0
    %1007 = vmatpush1.msra.mxu0 %v986
    %1008 = vmatprep.subr.mxu0 0.0
    %1009 = vmatpush1.msra.mxu0 %v987
    %1010 = vmatprep.subr.mxu0 0.0
    %1011 = vmatpush1.msra.mxu0 %v988
    %1012 = vmatprep.subr.mxu0 0.0
    %1013 = vmatpush1.msra.mxu0 %v989
    %1014 = vmatprep.subr.mxu0 0.0
    %1015 = vmatpush1.msra.mxu0 %v990
    %1016 = vmatprep.subr.mxu0 0.0
    %1017 = vmatpush1.msra.mxu0 %v991
    %1018 = vmatprep.subr.mxu0 0.0
    %1019 = vmatpush1.msra.mxu0 %v992
    %1020 = vmatprep.subr.mxu0 0.0
    %1021 = vmatpush1.msra.mxu0 %v993
    %1022 = vmatprep.subr.mxu0 0.0
    %1023 = vmatpush1.msra.mxu0 %v994
    %1024 = vmatprep.subr.mxu0 0.0
    %1025 = vmatpush1.msra.mxu0 %v995
    %1026 = vmatprep.subr.mxu0 0.0
    %1027 = vmatpush1.msra.mxu0 %v996
    %1028 = vmatprep.subr.mxu0 0.0
    %1029 = vmatpush1.msra.mxu0 %v997
    %1030 = vmatprep.subr.mxu0 0.0
    %1031 = vmatpush1.msra.mxu0 0.0
    %1032 = vmatprep.subr.mxu0 0.0
    %1033 = vmatpush1.msra.mxu0 0.0
    %1034 = vmatprep.subr.mxu0 0.0
    %1035 = vmatpush1.msra.mxu0 0.0
    %1036 = vmatprep.subr.mxu0 0.0
    %1037 = vmatpush1.msra.mxu0 0.0
    %1038 = vmatprep.subr.mxu0 0.0
    %1039 = vmatpush1.msra.mxu0 0.0
    %1040 = vmatprep.subr.mxu0 0.0
    %1041 = vmatpush1.msra.mxu0 0.0
    %1042 = vmatprep.subr.mxu0 0.0
    %1043 = vmatpush1.msra.mxu0 0.0
    %1044 = vmatprep.subr.mxu0 0.0
    %1045 = vmatpush1.msra.mxu0 0.0
    %1046 = vmatprep.subr.mxu0 0.0
    %1047 = vmatpush1.msra.mxu0 0.0
    %1048 = vmatprep.subr.mxu0 0.0
    %1049 = vmatpush1.msra.mxu0 0.0
    %1050 = vmatprep.subr.mxu0 0.0
    %1051 = vmatpush1.msra.mxu0 0.0
    %1052 = vmatprep.subr.mxu0 0.0
    %1053 = vmatpush1.msra.mxu0 0.0
    %1054 = vmatprep.subr.mxu0 0.0
    %1055 = vmatpush1.msra.mxu0 0.0
    %1056 = vmatprep.subr.mxu0 0.0
    %1057 = vmatpush1.msra.mxu0 0.0
    %1058 = vmatprep.subr.mxu0 0.0
    %1059 = vmatpush1.msra.mxu0 0.0
    %1060 = vmatprep.subr.mxu0 0.0
    %1061 = vmatpush1.msra.mxu0 0.0
    %1062 = vmatprep.mubr.f32.mxu0 0.0
    %1063 = vmatmul.mubr.f32.gmra.mrb[0].mxu0 %v980
    %v1064 = vpop.f32.mrb[0].mxu0
    %v1065 = vadd.f32 0.0, %v1064
    %v1066 = vpop.f32.mrb[0].mxu0
    %1067 = vdwg.mxu0
    %v1068 = vmul.f32 %v885, %v87
    %v1069 = vadd.f32 %v1068, %v1065
    %vm1070 = vcmp.gt.f32.partialorder %v1069, %v82
    %v1071 = vsel %vm1070, 1, 0
    %v1072 = vcvt.s32.f32 %v1071
    %v1073 = vsel %vm1070, 0.0, %v1069
    %v1074 = vld [vmem:[#allocation9] sm:$0xff]
    %v1075 = vld [vmem:[#allocation9 + $0x8] sm:$0xff]
    %v1076 = vld [vmem:[#allocation9 + $0x10] sm:$0xff]
    %v1077 = vld [vmem:[#allocation9 + $0x18] sm:$0xff]
    %v1078 = vld [vmem:[#allocation9 + $0x20] sm:$0xff]
    %v1079 = vld [vmem:[#allocation9 + $0x28] sm:$0xff]
    %v1080 = vld [vmem:[#allocation9 + $0x30] sm:$0xff]
    %v1081 = vld [vmem:[#allocation9 + $0x38] sm:$0xff]
    %v1082 = vld [vmem:[#allocation9 + $0x40] sm:$0xff]
    %v1083 = vld [vmem:[#allocation9 + $0x48] sm:$0xff]
    %v1084 = vld [vmem:[#allocation9 + $0x50] sm:$0xff]
    %v1085 = vld [vmem:[#allocation9 + $0x58] sm:$0xff]
    %v1086 = vld [vmem:[#allocation9 + $0x60] sm:$0xff]
    %v1087 = vld [vmem:[#allocation9 + $0x68] sm:$0xff]
    %v1088 = vld [vmem:[#allocation9 + $0x70] sm:$0xff]
    %v1089 = vld [vmem:[#allocation9 + $0x78] sm:$0xff]
    %1090 = vmatprep.subr.mxu0 0.0
    %1091 = vmatpush1.msra.mxu0 %v1074
    %1092 = vmatprep.subr.mxu0 0.0
    %1093 = vmatpush1.msra.mxu0 %v1075
    %1094 = vmatprep.subr.mxu0 0.0
    %1095 = vmatpush1.msra.mxu0 %v1076
    %1096 = vmatprep.subr.mxu0 0.0
    %1097 = vmatpush1.msra.mxu0 %v1077
    %1098 = vmatprep.subr.mxu0 0.0
    %1099 = vmatpush1.msra.mxu0 %v1078
    %1100 = vmatprep.subr.mxu0 0.0
    %1101 = vmatpush1.msra.mxu0 %v1079
    %1102 = vmatprep.subr.mxu0 0.0
    %1103 = vmatpush1.msra.mxu0 %v1080
    %1104 = vmatprep.subr.mxu0 0.0
    %1105 = vmatpush1.msra.mxu0 %v1081
    %1106 = vmatprep.subr.mxu0 0.0
    %1107 = vmatpush1.msra.mxu0 %v1082
    %1108 = vmatprep.subr.mxu0 0.0
    %1109 = vmatpush1.msra.mxu0 %v1083
    %1110 = vmatprep.subr.mxu0 0.0
    %1111 = vmatpush1.msra.mxu0 %v1084
    %1112 = vmatprep.subr.mxu0 0.0
    %1113 = vmatpush1.msra.mxu0 %v1085
    %1114 = vmatprep.subr.mxu0 0.0
    %1115 = vmatpush1.msra.mxu0 %v1086
    %1116 = vmatprep.subr.mxu0 0.0
    %1117 = vmatpush1.msra.mxu0 %v1087
    %1118 = vmatprep.subr.mxu0 0.0
    %1119 = vmatpush1.msra.mxu0 %v1088
    %1120 = vmatprep.subr.mxu0 0.0
    %1121 = vmatpush1.msra.mxu0 %v1089
    %1122 = vmatprep.subr.mxu0 0.0
    %1123 = vmatpush1.msra.mxu0 0.0
    %1124 = vmatprep.subr.mxu0 0.0
    %1125 = vmatpush1.msra.mxu0 0.0
    %1126 = vmatprep.subr.mxu0 0.0
    %1127 = vmatpush1.msra.mxu0 0.0
    %1128 = vmatprep.subr.mxu0 0.0
    %1129 = vmatpush1.msra.mxu0 0.0
    %1130 = vmatprep.subr.mxu0 0.0
    %1131 = vmatpush1.msra.mxu0 0.0
    %1132 = vmatprep.subr.mxu0 0.0
    %1133 = vmatpush1.msra.mxu0 0.0
    %1134 = vmatprep.subr.mxu0 0.0
    %1135 = vmatpush1.msra.mxu0 0.0
    %1136 = vmatprep.subr.mxu0 0.0
    %1137 = vmatpush1.msra.mxu0 0.0
    %1138 = vmatprep.subr.mxu0 0.0
    %1139 = vmatpush1.msra.mxu0 0.0
    %1140 = vmatprep.subr.mxu0 0.0
    %1141 = vmatpush1.msra.mxu0 0.0
    %1142 = vmatprep.subr.mxu0 0.0
    %1143 = vmatpush1.msra.mxu0 0.0
    %1144 = vmatprep.subr.mxu0 0.0
    %1145 = vmatpush1.msra.mxu0 0.0
    %1146 = vmatprep.subr.mxu0 0.0
    %1147 = vmatpush1.msra.mxu0 0.0
    %1148 = vmatprep.subr.mxu0 0.0
    %1149 = vmatpush1.msra.mxu0 0.0
    %1150 = vmatprep.subr.mxu0 0.0
    %1151 = vmatpush1.msra.mxu0 0.0
    %1152 = vmatprep.subr.mxu0 0.0
    %1153 = vmatpush1.msra.mxu0 0.0
    %1154 = vmatprep.mubr.f32.mxu0 0.0
    %1155 = vmatmul.mubr.f32.gmra.mrb[0].mxu0 %v1072
    %v1156 = vpop.f32.mrb[0].mxu0
    %v1157 = vadd.f32 0.0, %v1156
    %v1158 = vpop.f32.mrb[0].mxu0
    %1159 = vdwg.mxu0
    %v1160 = vmul.f32 %v973, %v92
    %v1161 = vadd.f32 %v1160, %v1157
    %s1162 = scalar_lea.vmem %s5, 32
    %1163 = vst [vmem:[%s1162] sm:$0xff] %v1161
    %v1164 = vmul.f32 %v981, %v77
    %v1165 = vadd.f32 %v1164, %v209
    %vm1166 = vcmp.gt.f32.partialorder %v1165, %v72
    %v1167 = vsel %vm1166, 1, 0
    %v1168 = vcvt.s32.f32 %v1167
    %v1169 = vsel %vm1166, 0.0, %v1165
    %v1170 = vld [vmem:[#allocation7] sm:$0xff]
    %v1171 = vld [vmem:[#allocation7 + $0x8] sm:$0xff]
    %v1172 = vld [vmem:[#allocation7 + $0x10] sm:$0xff]
    %v1173 = vld [vmem:[#allocation7 + $0x18] sm:$0xff]
    %v1174 = vld [vmem:[#allocation7 + $0x20] sm:$0xff]
    %v1175 = vld [vmem:[#allocation7 + $0x28] sm:$0xff]
    %v1176 = vld [vmem:[#allocation7 + $0x30] sm:$0xff]
    %v1177 = vld [vmem:[#allocation7 + $0x38] sm:$0xff]
    %v1178 = vld [vmem:[#allocation7 + $0x40] sm:$0xff]
    %v1179 = vld [vmem:[#allocation7 + $0x48] sm:$0xff]
    %v1180 = vld [vmem:[#allocation7 + $0x50] sm:$0xff]
    %v1181 = vld [vmem:[#allocation7 + $0x58] sm:$0xff]
    %v1182 = vld [vmem:[#allocation7 + $0x60] sm:$0xff]
    %v1183 = vld [vmem:[#allocation7 + $0x68] sm:$0xff]
    %v1184 = vld [vmem:[#allocation7 + $0x70] sm:$0xff]
    %v1185 = vld [vmem:[#allocation7 + $0x78] sm:$0xff]
    %1186 = vmatprep.subr.mxu0 0.0
    %1187 = vmatpush1.msra.mxu0 %v1170
    %1188 = vmatprep.subr.mxu0 0.0
    %1189 = vmatpush1.msra.mxu0 %v1171
    %1190 = vmatprep.subr.mxu0 0.0
    %1191 = vmatpush1.msra.mxu0 %v1172
    %1192 = vmatprep.subr.mxu0 0.0
    %1193 = vmatpush1.msra.mxu0 %v1173
    %1194 = vmatprep.subr.mxu0 0.0
    %1195 = vmatpush1.msra.mxu0 %v1174
    %1196 = vmatprep.subr.mxu0 0.0
    %1197 = vmatpush1.msra.mxu0 %v1175
    %1198 = vmatprep.subr.mxu0 0.0
    %1199 = vmatpush1.msra.mxu0 %v1176
    %1200 = vmatprep.subr.mxu0 0.0
    %1201 = vmatpush1.msra.mxu0 %v1177
    %1202 = vmatprep.subr.mxu0 0.0
    %1203 = vmatpush1.msra.mxu0 %v1178
    %1204 = vmatprep.subr.mxu0 0.0
    %1205 = vmatpush1.msra.mxu0 %v1179
    %1206 = vmatprep.subr.mxu0 0.0
    %1207 = vmatpush1.msra.mxu0 %v1180
    %1208 = vmatprep.subr.mxu0 0.0
    %1209 = vmatpush1.msra.mxu0 %v1181
    %1210 = vmatprep.subr.mxu0 0.0
    %1211 = vmatpush1.msra.mxu0 %v1182
    %1212 = vmatprep.subr.mxu0 0.0
    %1213 = vmatpush1.msra.mxu0 %v1183
    %1214 = vmatprep.subr.mxu0 0.0
    %1215 = vmatpush1.msra.mxu0 %v1184
    %1216 = vmatprep.subr.mxu0 0.0
    %1217 = vmatpush1.msra.mxu0 %v1185
    %1218 = vmatprep.subr.mxu0 0.0
    %1219 = vmatpush1.msra.mxu0 0.0
    %1220 = vmatprep.subr.mxu0 0.0
    %1221 = vmatpush1.msra.mxu0 0.0
    %1222 = vmatprep.subr.mxu0 0.0
    %1223 = vmatpush1.msra.mxu0 0.0
    %1224 = vmatprep.subr.mxu0 0.0
    %1225 = vmatpush1.msra.mxu0 0.0
    %1226 = vmatprep.subr.mxu0 0.0
    %1227 = vmatpush1.msra.mxu0 0.0
    %1228 = vmatprep.subr.mxu0 0.0
    %1229 = vmatpush1.msra.mxu0 0.0
    %1230 = vmatprep.subr.mxu0 0.0
    %1231 = vmatpush1.msra.mxu0 0.0
    %1232 = vmatprep.subr.mxu0 0.0
    %1233 = vmatpush1.msra.mxu0 0.0
    %1234 = vmatprep.subr.mxu0 0.0
    %1235 = vmatpush1.msra.mxu0 0.0
    %1236 = vmatprep.subr.mxu0 0.0
    %1237 = vmatpush1.msra.mxu0 0.0
    %1238 = vmatprep.subr.mxu0 0.0
    %1239 = vmatpush1.msra.mxu0 0.0
    %1240 = vmatprep.subr.mxu0 0.0
    %1241 = vmatpush1.msra.mxu0 0.0
    %1242 = vmatprep.subr.mxu0 0.0
    %1243 = vmatpush1.msra.mxu0 0.0
    %1244 = vmatprep.subr.mxu0 0.0
    %1245 = vmatpush1.msra.mxu0 0.0
    %1246 = vmatprep.subr.mxu0 0.0
    %1247 = vmatpush1.msra.mxu0 0.0
    %1248 = vmatprep.subr.mxu0 0.0
    %1249 = vmatpush1.msra.mxu0 0.0
    %1250 = vmatprep.mubr.f32.mxu0 0.0
    %1251 = vmatmul.mubr.f32.gmra.mrb[0].mxu0 %v1168
    %v1252 = vpop.f32.mrb[0].mxu0
    %v1253 = vadd.f32 0.0, %v1252
    %v1254 = vpop.f32.mrb[0].mxu0
    %1255 = vdwg.mxu0
    %v1256 = vmul.f32 %v1073, %v87
    %v1257 = vadd.f32 %v1256, %v1253
    %vm1258 = vcmp.gt.f32.partialorder %v1257, %v82
    %v1259 = vsel %vm1258, 1, 0
    %v1260 = vcvt.s32.f32 %v1259
    %v1261 = vsel %vm1258, 0.0, %v1257
    %v1262 = vld [vmem:[#allocation9] sm:$0xff]
    %v1263 = vld [vmem:[#allocation9 + $0x8] sm:$0xff]
    %v1264 = vld [vmem:[#allocation9 + $0x10] sm:$0xff]
    %v1265 = vld [vmem:[#allocation9 + $0x18] sm:$0xff]
    %v1266 = vld [vmem:[#allocation9 + $0x20] sm:$0xff]
    %v1267 = vld [vmem:[#allocation9 + $0x28] sm:$0xff]
    %v1268 = vld [vmem:[#allocation9 + $0x30] sm:$0xff]
    %v1269 = vld [vmem:[#allocation9 + $0x38] sm:$0xff]
    %v1270 = vld [vmem:[#allocation9 + $0x40] sm:$0xff]
    %v1271 = vld [vmem:[#allocation9 + $0x48] sm:$0xff]
    %v1272 = vld [vmem:[#allocation9 + $0x50] sm:$0xff]
    %v1273 = vld [vmem:[#allocation9 + $0x58] sm:$0xff]
    %v1274 = vld [vmem:[#allocation9 + $0x60] sm:$0xff]
    %v1275 = vld [vmem:[#allocation9 + $0x68] sm:$0xff]
    %v1276 = vld [vmem:[#allocation9 + $0x70] sm:$0xff]
    %v1277 = vld [vmem:[#allocation9 + $0x78] sm:$0xff]
    %1278 = vmatprep.subr.mxu0 0.0
    %1279 = vmatpush1.msra.mxu0 %v1262
    %1280 = vmatprep.subr.mxu0 0.0
    %1281 = vmatpush1.msra.mxu0 %v1263
    %1282 = vmatprep.subr.mxu0 0.0
    %1283 = vmatpush1.msra.mxu0 %v1264
    %1284 = vmatprep.subr.mxu0 0.0
    %1285 = vmatpush1.msra.mxu0 %v1265
    %1286 = vmatprep.subr.mxu0 0.0
    %1287 = vmatpush1.msra.mxu0 %v1266
    %1288 = vmatprep.subr.mxu0 0.0
    %1289 = vmatpush1.msra.mxu0 %v1267
    %1290 = vmatprep.subr.mxu0 0.0
    %1291 = vmatpush1.msra.mxu0 %v1268
    %1292 = vmatprep.subr.mxu0 0.0
    %1293 = vmatpush1.msra.mxu0 %v1269
    %1294 = vmatprep.subr.mxu0 0.0
    %1295 = vmatpush1.msra.mxu0 %v1270
    %1296 = vmatprep.subr.mxu0 0.0
    %1297 = vmatpush1.msra.mxu0 %v1271
    %1298 = vmatprep.subr.mxu0 0.0
    %1299 = vmatpush1.msra.mxu0 %v1272
    %1300 = vmatprep.subr.mxu0 0.0
    %1301 = vmatpush1.msra.mxu0 %v1273
    %1302 = vmatprep.subr.mxu0 0.0
    %1303 = vmatpush1.msra.mxu0 %v1274
    %1304 = vmatprep.subr.mxu0 0.0
    %1305 = vmatpush1.msra.mxu0 %v1275
    %1306 = vmatprep.subr.mxu0 0.0
    %1307 = vmatpush1.msra.mxu0 %v1276
    %1308 = vmatprep.subr.mxu0 0.0
    %1309 = vmatpush1.msra.mxu0 %v1277
    %1310 = vmatprep.subr.mxu0 0.0
    %1311 = vmatpush1.msra.mxu0 0.0
    %1312 = vmatprep.subr.mxu0 0.0
    %1313 = vmatpush1.msra.mxu0 0.0
    %1314 = vmatprep.subr.mxu0 0.0
    %1315 = vmatpush1.msra.mxu0 0.0
    %1316 = vmatprep.subr.mxu0 0.0
    %1317 = vmatpush1.msra.mxu0 0.0
    %1318 = vmatprep.subr.mxu0 0.0
    %1319 = vmatpush1.msra.mxu0 0.0
    %1320 = vmatprep.subr.mxu0 0.0
    %1321 = vmatpush1.msra.mxu0 0.0
    %1322 = vmatprep.subr.mxu0 0.0
    %1323 = vmatpush1.msra.mxu0 0.0
    %1324 = vmatprep.subr.mxu0 0.0
    %1325 = vmatpush1.msra.mxu0 0.0
    %1326 = vmatprep.subr.mxu0 0.0
    %1327 = vmatpush1.msra.mxu0 0.0
    %1328 = vmatprep.subr.mxu0 0.0
    %1329 = vmatpush1.msra.mxu0 0.0
    %1330 = vmatprep.subr.mxu0 0.0
    %1331 = vmatpush1.msra.mxu0 0.0
    %1332 = vmatprep.subr.mxu0 0.0
    %1333 = vmatpush1.msra.mxu0 0.0
    %1334 = vmatprep.subr.mxu0 0.0
    %1335 = vmatpush1.msra.mxu0 0.0
    %1336 = vmatprep.subr.mxu0 0.0
    %1337 = vmatpush1.msra.mxu0 0.0
    %1338 = vmatprep.subr.mxu0 0.0
    %1339 = vmatpush1.msra.mxu0 0.0
    %1340 = vmatprep.subr.mxu0 0.0
    %1341 = vmatpush1.msra.mxu0 0.0
    %1342 = vmatprep.mubr.f32.mxu0 0.0
    %1343 = vmatmul.mubr.f32.gmra.mrb[0].mxu0 %v1260
    %v1344 = vpop.f32.mrb[0].mxu0
    %v1345 = vadd.f32 0.0, %v1344
    %v1346 = vpop.f32.mrb[0].mxu0
    %1347 = vdwg.mxu0
    %v1348 = vmul.f32 %v1161, %v92
    %v1349 = vadd.f32 %v1348, %v1345
    %s1350 = scalar_lea.vmem %s5, 40
    %1351 = vst [vmem:[%s1350] sm:$0xff] %v1349
    %v1352 = vmul.f32 %v1169, %v77
    %v1353 = vadd.f32 %v1352, %v214
    %vm1354 = vcmp.gt.f32.partialorder %v1353, %v72
    %v1355 = vsel %vm1354, 1, 0
    %v1356 = vcvt.s32.f32 %v1355
    %v1357 = vsel %vm1354, 0.0, %v1353
    %v1358 = vld [vmem:[#allocation7] sm:$0xff]
    %v1359 = vld [vmem:[#allocation7 + $0x8] sm:$0xff]
    %v1360 = vld [vmem:[#allocation7 + $0x10] sm:$0xff]
    %v1361 = vld [vmem:[#allocation7 + $0x18] sm:$0xff]
    %v1362 = vld [vmem:[#allocation7 + $0x20] sm:$0xff]
    %v1363 = vld [vmem:[#allocation7 + $0x28] sm:$0xff]
    %v1364 = vld [vmem:[#allocation7 + $0x30] sm:$0xff]
    %v1365 = vld [vmem:[#allocation7 + $0x38] sm:$0xff]
    %v1366 = vld [vmem:[#allocation7 + $0x40] sm:$0xff]
    %v1367 = vld [vmem:[#allocation7 + $0x48] sm:$0xff]
    %v1368 = vld [vmem:[#allocation7 + $0x50] sm:$0xff]
    %v1369 = vld [vmem:[#allocation7 + $0x58] sm:$0xff]
    %v1370 = vld [vmem:[#allocation7 + $0x60] sm:$0xff]
    %v1371 = vld [vmem:[#allocation7 + $0x68] sm:$0xff]
    %v1372 = vld [vmem:[#allocation7 + $0x70] sm:$0xff]
    %v1373 = vld [vmem:[#allocation7 + $0x78] sm:$0xff]
    %1374 = vmatprep.subr.mxu0 0.0
    %1375 = vmatpush1.msra.mxu0 %v1358
    %1376 = vmatprep.subr.mxu0 0.0
    %1377 = vmatpush1.msra.mxu0 %v1359
    %1378 = vmatprep.subr.mxu0 0.0
    %1379 = vmatpush1.msra.mxu0 %v1360
    %1380 = vmatprep.subr.mxu0 0.0
    %1381 = vmatpush1.msra.mxu0 %v1361
    %1382 = vmatprep.subr.mxu0 0.0
    %1383 = vmatpush1.msra.mxu0 %v1362
    %1384 = vmatprep.subr.mxu0 0.0
    %1385 = vmatpush1.msra.mxu0 %v1363
    %1386 = vmatprep.subr.mxu0 0.0
    %1387 = vmatpush1.msra.mxu0 %v1364
    %1388 = vmatprep.subr.mxu0 0.0
    %1389 = vmatpush1.msra.mxu0 %v1365
    %1390 = vmatprep.subr.mxu0 0.0
    %1391 = vmatpush1.msra.mxu0 %v1366
    %1392 = vmatprep.subr.mxu0 0.0
    %1393 = vmatpush1.msra.mxu0 %v1367
    %1394 = vmatprep.subr.mxu0 0.0
    %1395 = vmatpush1.msra.mxu0 %v1368
    %1396 = vmatprep.subr.mxu0 0.0
    %1397 = vmatpush1.msra.mxu0 %v1369
    %1398 = vmatprep.subr.mxu0 0.0
    %1399 = vmatpush1.msra.mxu0 %v1370
    %1400 = vmatprep.subr.mxu0 0.0
    %1401 = vmatpush1.msra.mxu0 %v1371
    %1402 = vmatprep.subr.mxu0 0.0
    %1403 = vmatpush1.msra.mxu0 %v1372
    %1404 = vmatprep.subr.mxu0 0.0
    %1405 = vmatpush1.msra.mxu0 %v1373
    %1406 = vmatprep.subr.mxu0 0.0
    %1407 = vmatpush1.msra.mxu0 0.0
    %1408 = vmatprep.subr.mxu0 0.0
    %1409 = vmatpush1.msra.mxu0 0.0
    %1410 = vmatprep.subr.mxu0 0.0
    %1411 = vmatpush1.msra.mxu0 0.0
    %1412 = vmatprep.subr.mxu0 0.0
    %1413 = vmatpush1.msra.mxu0 0.0
    %1414 = vmatprep.subr.mxu0 0.0
    %1415 = vmatpush1.msra.mxu0 0.0
    %1416 = vmatprep.subr.mxu0 0.0
    %1417 = vmatpush1.msra.mxu0 0.0
    %1418 = vmatprep.subr.mxu0 0.0
    %1419 = vmatpush1.msra.mxu0 0.0
    %1420 = vmatprep.subr.mxu0 0.0
    %1421 = vmatpush1.msra.mxu0 0.0
    %1422 = vmatprep.subr.mxu0 0.0
    %1423 = vmatpush1.msra.mxu0 0.0
    %1424 = vmatprep.subr.mxu0 0.0
    %1425 = vmatpush1.msra.mxu0 0.0
    %1426 = vmatprep.subr.mxu0 0.0
    %1427 = vmatpush1.msra.mxu0 0.0
    %1428 = vmatprep.subr.mxu0 0.0
    %1429 = vmatpush1.msra.mxu0 0.0
    %1430 = vmatprep.subr.mxu0 0.0
    %1431 = vmatpush1.msra.mxu0 0.0
    %1432 = vmatprep.subr.mxu0 0.0
    %1433 = vmatpush1.msra.mxu0 0.0
    %1434 = vmatprep.subr.mxu0 0.0
    %1435 = vmatpush1.msra.mxu0 0.0
    %1436 = vmatprep.subr.mxu0 0.0
    %1437 = vmatpush1.msra.mxu0 0.0
    %1438 = vmatprep.mubr.f32.mxu0 0.0
    %1439 = vmatmul.mubr.f32.gmra.mrb[0].mxu0 %v1356
    %v1440 = vpop.f32.mrb[0].mxu0
    %v1441 = vadd.f32 0.0, %v1440
    %v1442 = vpop.f32.mrb[0].mxu0
    %1443 = vdwg.mxu0
    %v1444 = vmul.f32 %v1261, %v87
    %v1445 = vadd.f32 %v1444, %v1441
    %vm1446 = vcmp.gt.f32.partialorder %v1445, %v82
    %v1447 = vsel %vm1446, 1, 0
    %v1448 = vcvt.s32.f32 %v1447
    %v1449 = vsel %vm1446, 0.0, %v1445
    %v1450 = vld [vmem:[#allocation9] sm:$0xff]
    %v1451 = vld [vmem:[#allocation9 + $0x8] sm:$0xff]
    %v1452 = vld [vmem:[#allocation9 + $0x10] sm:$0xff]
    %v1453 = vld [vmem:[#allocation9 + $0x18] sm:$0xff]
    %v1454 = vld [vmem:[#allocation9 + $0x20] sm:$0xff]
    %v1455 = vld [vmem:[#allocation9 + $0x28] sm:$0xff]
    %v1456 = vld [vmem:[#allocation9 + $0x30] sm:$0xff]
    %v1457 = vld [vmem:[#allocation9 + $0x38] sm:$0xff]
    %v1458 = vld [vmem:[#allocation9 + $0x40] sm:$0xff]
    %v1459 = vld [vmem:[#allocation9 + $0x48] sm:$0xff]
    %v1460 = vld [vmem:[#allocation9 + $0x50] sm:$0xff]
    %v1461 = vld [vmem:[#allocation9 + $0x58] sm:$0xff]
    %v1462 = vld [vmem:[#allocation9 + $0x60] sm:$0xff]
    %v1463 = vld [vmem:[#allocation9 + $0x68] sm:$0xff]
    %v1464 = vld [vmem:[#allocation9 + $0x70] sm:$0xff]
    %v1465 = vld [vmem:[#allocation9 + $0x78] sm:$0xff]
    %1466 = vmatprep.subr.mxu0 0.0
    %1467 = vmatpush1.msra.mxu0 %v1450
    %1468 = vmatprep.subr.mxu0 0.0
    %1469 = vmatpush1.msra.mxu0 %v1451
    %1470 = vmatprep.subr.mxu0 0.0
    %1471 = vmatpush1.msra.mxu0 %v1452
    %1472 = vmatprep.subr.mxu0 0.0
    %1473 = vmatpush1.msra.mxu0 %v1453
    %1474 = vmatprep.subr.mxu0 0.0
    %1475 = vmatpush1.msra.mxu0 %v1454
    %1476 = vmatprep.subr.mxu0 0.0
    %1477 = vmatpush1.msra.mxu0 %v1455
    %1478 = vmatprep.subr.mxu0 0.0
    %1479 = vmatpush1.msra.mxu0 %v1456
    %1480 = vmatprep.subr.mxu0 0.0
    %1481 = vmatpush1.msra.mxu0 %v1457
    %1482 = vmatprep.subr.mxu0 0.0
    %1483 = vmatpush1.msra.mxu0 %v1458
    %1484 = vmatprep.subr.mxu0 0.0
    %1485 = vmatpush1.msra.mxu0 %v1459
    %1486 = vmatprep.subr.mxu0 0.0
    %1487 = vmatpush1.msra.mxu0 %v1460
    %1488 = vmatprep.subr.mxu0 0.0
    %1489 = vmatpush1.msra.mxu0 %v1461
    %1490 = vmatprep.subr.mxu0 0.0
    %1491 = vmatpush1.msra.mxu0 %v1462
    %1492 = vmatprep.subr.mxu0 0.0
    %1493 = vmatpush1.msra.mxu0 %v1463
    %1494 = vmatprep.subr.mxu0 0.0
    %1495 = vmatpush1.msra.mxu0 %v1464
    %1496 = vmatprep.subr.mxu0 0.0
    %1497 = vmatpush1.msra.mxu0 %v1465
    %1498 = vmatprep.subr.mxu0 0.0
    %1499 = vmatpush1.msra.mxu0 0.0
    %1500 = vmatprep.subr.mxu0 0.0
    %1501 = vmatpush1.msra.mxu0 0.0
    %1502 = vmatprep.subr.mxu0 0.0
    %1503 = vmatpush1.msra.mxu0 0.0
    %1504 = vmatprep.subr.mxu0 0.0
    %1505 = vmatpush1.msra.mxu0 0.0
    %1506 = vmatprep.subr.mxu0 0.0
    %1507 = vmatpush1.msra.mxu0 0.0
    %1508 = vmatprep.subr.mxu0 0.0
    %1509 = vmatpush1.msra.mxu0 0.0
    %1510 = vmatprep.subr.mxu0 0.0
    %1511 = vmatpush1.msra.mxu0 0.0
    %1512 = vmatprep.subr.mxu0 0.0
    %1513 = vmatpush1.msra.mxu0 0.0
    %1514 = vmatprep.subr.mxu0 0.0
    %1515 = vmatpush1.msra.mxu0 0.0
    %1516 = vmatprep.subr.mxu0 0.0
    %1517 = vmatpush1.msra.mxu0 0.0
    %1518 = vmatprep.subr.mxu0 0.0
    %1519 = vmatpush1.msra.mxu0 0.0
    %1520 = vmatprep.subr.mxu0 0.0
    %1521 = vmatpush1.msra.mxu0 0.0
    %1522 = vmatprep.subr.mxu0 0.0
    %1523 = vmatpush1.msra.mxu0 0.0
    %1524 = vmatprep.subr.mxu0 0.0
    %1525 = vmatpush1.msra.mxu0 0.0
    %1526 = vmatprep.subr.mxu0 0.0
    %1527 = vmatpush1.msra.mxu0 0.0
    %1528 = vmatprep.subr.mxu0 0.0
    %1529 = vmatpush1.msra.mxu0 0.0
    %1530 = vmatprep.mubr.f32.mxu0 0.0
    %1531 = vmatmul.mubr.f32.gmra.mrb[0].mxu0 %v1448
    %v1532 = vpop.f32.mrb[0].mxu0
    %v1533 = vadd.f32 0.0, %v1532
    %v1534 = vpop.f32.mrb[0].mxu0
    %1535 = vdwg.mxu0
    %v1536 = vmul.f32 %v1349, %v92
    %v1537 = vadd.f32 %v1536, %v1533
    %s1538 = scalar_lea.vmem %s5, 48
    %1539 = vst [vmem:[%s1538] sm:$0xff] %v1537
    %v1540 = vmul.f32 %v1357, %v77
    %v1541 = vadd.f32 %v1540, %v219
    %vm1542 = vcmp.gt.f32.partialorder %v1541, %v72
    %v1543 = vsel %vm1542, 1, 0
    %v1544 = vcvt.s32.f32 %v1543
    %v1545 = vsel %vm1542, 0.0, %v1541
    %v1546 = vld [vmem:[#allocation7] sm:$0xff]
    %v1547 = vld [vmem:[#allocation7 + $0x8] sm:$0xff]
    %v1548 = vld [vmem:[#allocation7 + $0x10] sm:$0xff]
    %v1549 = vld [vmem:[#allocation7 + $0x18] sm:$0xff]
    %v1550 = vld [vmem:[#allocation7 + $0x20] sm:$0xff]
    %v1551 = vld [vmem:[#allocation7 + $0x28] sm:$0xff]
    %v1552 = vld [vmem:[#allocation7 + $0x30] sm:$0xff]
    %v1553 = vld [vmem:[#allocation7 + $0x38] sm:$0xff]
    %v1554 = vld [vmem:[#allocation7 + $0x40] sm:$0xff]
    %v1555 = vld [vmem:[#allocation7 + $0x48] sm:$0xff]
    %v1556 = vld [vmem:[#allocation7 + $0x50] sm:$0xff]
    %v1557 = vld [vmem:[#allocation7 + $0x58] sm:$0xff]
    %v1558 = vld [vmem:[#allocation7 + $0x60] sm:$0xff]
    %v1559 = vld [vmem:[#allocation7 + $0x68] sm:$0xff]
    %v1560 = vld [vmem:[#allocation7 + $0x70] sm:$0xff]
    %v1561 = vld [vmem:[#allocation7 + $0x78] sm:$0xff]
    %1562 = vmatprep.subr.mxu0 0.0
    %1563 = vmatpush1.msra.mxu0 %v1546
    %1564 = vmatprep.subr.mxu0 0.0
    %1565 = vmatpush1.msra.mxu0 %v1547
    %1566 = vmatprep.subr.mxu0 0.0
    %1567 = vmatpush1.msra.mxu0 %v1548
    %1568 = vmatprep.subr.mxu0 0.0
    %1569 = vmatpush1.msra.mxu0 %v1549
    %1570 = vmatprep.subr.mxu0 0.0
    %1571 = vmatpush1.msra.mxu0 %v1550
    %1572 = vmatprep.subr.mxu0 0.0
    %1573 = vmatpush1.msra.mxu0 %v1551
    %1574 = vmatprep.subr.mxu0 0.0
    %1575 = vmatpush1.msra.mxu0 %v1552
    %1576 = vmatprep.subr.mxu0 0.0
    %1577 = vmatpush1.msra.mxu0 %v1553
    %1578 = vmatprep.subr.mxu0 0.0
    %1579 = vmatpush1.msra.mxu0 %v1554
    %1580 = vmatprep.subr.mxu0 0.0
    %1581 = vmatpush1.msra.mxu0 %v1555
    %1582 = vmatprep.subr.mxu0 0.0
    %1583 = vmatpush1.msra.mxu0 %v1556
    %1584 = vmatprep.subr.mxu0 0.0
    %1585 = vmatpush1.msra.mxu0 %v1557
    %1586 = vmatprep.subr.mxu0 0.0
    %1587 = vmatpush1.msra.mxu0 %v1558
    %1588 = vmatprep.subr.mxu0 0.0
    %1589 = vmatpush1.msra.mxu0 %v1559
    %1590 = vmatprep.subr.mxu0 0.0
    %1591 = vmatpush1.msra.mxu0 %v1560
    %1592 = vmatprep.subr.mxu0 0.0
    %1593 = vmatpush1.msra.mxu0 %v1561
    %1594 = vmatprep.subr.mxu0 0.0
    %1595 = vmatpush1.msra.mxu0 0.0
    %1596 = vmatprep.subr.mxu0 0.0
    %1597 = vmatpush1.msra.mxu0 0.0
    %1598 = vmatprep.subr.mxu0 0.0
    %1599 = vmatpush1.msra.mxu0 0.0
    %1600 = vmatprep.subr.mxu0 0.0
    %1601 = vmatpush1.msra.mxu0 0.0
    %1602 = vmatprep.subr.mxu0 0.0
    %1603 = vmatpush1.msra.mxu0 0.0
    %1604 = vmatprep.subr.mxu0 0.0
    %1605 = vmatpush1.msra.mxu0 0.0
    %1606 = vmatprep.subr.mxu0 0.0
    %1607 = vmatpush1.msra.mxu0 0.0
    %1608 = vmatprep.subr.mxu0 0.0
    %1609 = vmatpush1.msra.mxu0 0.0
    %1610 = vmatprep.subr.mxu0 0.0
    %1611 = vmatpush1.msra.mxu0 0.0
    %1612 = vmatprep.subr.mxu0 0.0
    %1613 = vmatpush1.msra.mxu0 0.0
    %1614 = vmatprep.subr.mxu0 0.0
    %1615 = vmatpush1.msra.mxu0 0.0
    %1616 = vmatprep.subr.mxu0 0.0
    %1617 = vmatpush1.msra.mxu0 0.0
    %1618 = vmatprep.subr.mxu0 0.0
    %1619 = vmatpush1.msra.mxu0 0.0
    %1620 = vmatprep.subr.mxu0 0.0
    %1621 = vmatpush1.msra.mxu0 0.0
    %1622 = vmatprep.subr.mxu0 0.0
    %1623 = vmatpush1.msra.mxu0 0.0
    %1624 = vmatprep.subr.mxu0 0.0
    %1625 = vmatpush1.msra.mxu0 0.0
    %1626 = vmatprep.mubr.f32.mxu0 0.0
    %1627 = vmatmul.mubr.f32.gmra.mrb[0].mxu0 %v1544
    %v1628 = vpop.f32.mrb[0].mxu0
    %v1629 = vadd.f32 0.0, %v1628
    %v1630 = vpop.f32.mrb[0].mxu0
    %1631 = vdwg.mxu0
    %v1632 = vmul.f32 %v1449, %v87
    %v1633 = vadd.f32 %v1632, %v1629
    %vm1634 = vcmp.gt.f32.partialorder %v1633, %v82
    %v1635 = vsel %vm1634, 1, 0
    %v1636 = vcvt.s32.f32 %v1635
    %v1637 = vsel %vm1634, 0.0, %v1633
    %v1638 = vld [vmem:[#allocation9] sm:$0xff]
    %v1639 = vld [vmem:[#allocation9 + $0x8] sm:$0xff]
    %v1640 = vld [vmem:[#allocation9 + $0x10] sm:$0xff]
    %v1641 = vld [vmem:[#allocation9 + $0x18] sm:$0xff]
    %v1642 = vld [vmem:[#allocation9 + $0x20] sm:$0xff]
    %v1643 = vld [vmem:[#allocation9 + $0x28] sm:$0xff]
    %v1644 = vld [vmem:[#allocation9 + $0x30] sm:$0xff]
    %v1645 = vld [vmem:[#allocation9 + $0x38] sm:$0xff]
    %v1646 = vld [vmem:[#allocation9 + $0x40] sm:$0xff]
    %v1647 = vld [vmem:[#allocation9 + $0x48] sm:$0xff]
    %v1648 = vld [vmem:[#allocation9 + $0x50] sm:$0xff]
    %v1649 = vld [vmem:[#allocation9 + $0x58] sm:$0xff]
    %v1650 = vld [vmem:[#allocation9 + $0x60] sm:$0xff]
    %v1651 = vld [vmem:[#allocation9 + $0x68] sm:$0xff]
    %v1652 = vld [vmem:[#allocation9 + $0x70] sm:$0xff]
    %v1653 = vld [vmem:[#allocation9 + $0x78] sm:$0xff]
    %1654 = vmatprep.subr.mxu0 0.0
    %1655 = vmatpush1.msra.mxu0 %v1638
    %1656 = vmatprep.subr.mxu0 0.0
    %1657 = vmatpush1.msra.mxu0 %v1639
    %1658 = vmatprep.subr.mxu0 0.0
    %1659 = vmatpush1.msra.mxu0 %v1640
    %1660 = vmatprep.subr.mxu0 0.0
    %1661 = vmatpush1.msra.mxu0 %v1641
    %1662 = vmatprep.subr.mxu0 0.0
    %1663 = vmatpush1.msra.mxu0 %v1642
    %1664 = vmatprep.subr.mxu0 0.0
    %1665 = vmatpush1.msra.mxu0 %v1643
    %1666 = vmatprep.subr.mxu0 0.0
    %1667 = vmatpush1.msra.mxu0 %v1644
    %1668 = vmatprep.subr.mxu0 0.0
    %1669 = vmatpush1.msra.mxu0 %v1645
    %1670 = vmatprep.subr.mxu0 0.0
    %1671 = vmatpush1.msra.mxu0 %v1646
    %1672 = vmatprep.subr.mxu0 0.0
    %1673 = vmatpush1.msra.mxu0 %v1647
    %1674 = vmatprep.subr.mxu0 0.0
    %1675 = vmatpush1.msra.mxu0 %v1648
    %1676 = vmatprep.subr.mxu0 0.0
    %1677 = vmatpush1.msra.mxu0 %v1649
    %1678 = vmatprep.subr.mxu0 0.0
    %1679 = vmatpush1.msra.mxu0 %v1650
    %1680 = vmatprep.subr.mxu0 0.0
    %1681 = vmatpush1.msra.mxu0 %v1651
    %1682 = vmatprep.subr.mxu0 0.0
    %1683 = vmatpush1.msra.mxu0 %v1652
    %1684 = vmatprep.subr.mxu0 0.0
    %1685 = vmatpush1.msra.mxu0 %v1653
    %1686 = vmatprep.subr.mxu0 0.0
    %1687 = vmatpush1.msra.mxu0 0.0
    %1688 = vmatprep.subr.mxu0 0.0
    %1689 = vmatpush1.msra.mxu0 0.0
    %1690 = vmatprep.subr.mxu0 0.0
    %1691 = vmatpush1.msra.mxu0 0.0
    %1692 = vmatprep.subr.mxu0 0.0
    %1693 = vmatpush1.msra.mxu0 0.0
    %1694 = vmatprep.subr.mxu0 0.0
    %1695 = vmatpush1.msra.mxu0 0.0
    %1696 = vmatprep.subr.mxu0 0.0
    %1697 = vmatpush1.msra.mxu0 0.0
    %1698 = vmatprep.subr.mxu0 0.0
    %1699 = vmatpush1.msra.mxu0 0.0
    %1700 = vmatprep.subr.mxu0 0.0
    %1701 = vmatpush1.msra.mxu0 0.0
    %1702 = vmatprep.subr.mxu0 0.0
    %1703 = vmatpush1.msra.mxu0 0.0
    %1704 = vmatprep.subr.mxu0 0.0
    %1705 = vmatpush1.msra.mxu0 0.0
    %1706 = vmatprep.subr.mxu0 0.0
    %1707 = vmatpush1.msra.mxu0 0.0
    %1708 = vmatprep.subr.mxu0 0.0
    %1709 = vmatpush1.msra.mxu0 0.0
    %1710 = vmatprep.subr.mxu0 0.0
    %1711 = vmatpush1.msra.mxu0 0.0
    %1712 = vmatprep.subr.mxu0 0.0
    %1713 = vmatpush1.msra.mxu0 0.0
    %1714 = vmatprep.subr.mxu0 0.0
    %1715 = vmatpush1.msra.mxu0 0.0
    %1716 = vmatprep.subr.mxu0 0.0
    %1717 = vmatpush1.msra.mxu0 0.0
    %1718 = vmatprep.mubr.f32.mxu0 0.0
    %1719 = vmatmul.mubr.f32.gmra.mrb[0].mxu0 %v1636
    %v1720 = vpop.f32.mrb[0].mxu0
    %v1721 = vadd.f32 0.0, %v1720
    %v1722 = vpop.f32.mrb[0].mxu0
    %1723 = vdwg.mxu0
    %v1724 = vmul.f32 %v1537, %v92
    %v1725 = vadd.f32 %v1724, %v1721
    %s1726 = scalar_lea.vmem %s5, 56
    %1727 = vst [vmem:[%s1726] sm:$0xff] %v1725
    %1728 = vst [vmem:[#allocation2] sm:$0xff] %v1545
    %1729 = vst [vmem:[#allocation3] sm:$0xff] %v1637
    %1730 = vst [vmem:[#allocation4] sm:$0xff] %v1725
    // Predicated region
    $region38: #{_lambda_.1} parent=1 // pred_check
      _
    $region39: #{_lambda_.1} parent=1 // pred_check_branch
      %1732 = sbr.rel (0) target = $region41
    $region40: #{_lambda_.1} parent=1 // pred_region
      _
    $region41: #{_lambda_.1} parent=1 // pred_fallthru
      _
    // Predicated region
    $region42: #{_lambda_.1} parent=1 // pred_check
      _
    $region43: #{_lambda_.1} parent=1 // pred_check_branch
      %1734 = sbr.rel (0) target = $region45
    $region44: #{_lambda_.1} parent=1 // pred_region
      _
    $region45: #{_lambda_.1} parent=1 // pred_fallthru
      _
    %1735 = vsyncpa [#allocation6], 1
    %1736 = vsyncpa [#allocation8], 1

</llo_original>
